<compile_context>
chip_gen: v6e
topology: v6e:2x2x1
jax: 0.10.0
libtpu: 0.0.40
codegen_flags: <defaults>
</compile_context>

<pallas_src>
import math
import functools

import jax
import jax.numpy as jnp
from jax.experimental import pallas as pl
from jax.experimental.pallas import tpu as pltpu

LN_EPS = 1e-5


# --------------------------------------------------------------------------- #
# Kernel
# --------------------------------------------------------------------------- #
def attention_block_kernel(x_ref, g_ref, b_ref, wq_ref, wk_ref, wv_ref,
                           bq_ref, bk_ref, bv_ref, wout_ref, bout_ref,
                           o_ref, xn_ref, *, n_heads):
    bt, L, C = x_ref.shape
    ch = C // n_heads
    R = bt * L

    # Flatten the batch tile: leading-dim merge only (lane dim unchanged).
    x = x_ref[...].reshape(R, C).astype(jnp.float32)

    # ---- LayerNorm over the channel dim (f32 vector math on all chips) ----
    mean = jnp.mean(x, axis=-1, keepdims=True)
    var = jnp.mean((x - mean) ** 2, axis=-1, keepdims=True)
    xn = (x - mean) * jax.lax.rsqrt(var + LN_EPS)
    xn = xn * g_ref[...] + b_ref[...]                  # (R, C)
    xn_ref[...] = xn                                   # stage residual in VMEM

    # ---- Q/K/V projections: three matmuls, bf16 operands, f32 accumulation.
    # The 1/sqrt(sqrt(ch)) QK scale is already folded into Wq/Wk/bq/bk.
    xn_bf = xn.astype(jnp.bfloat16)
    q = (jnp.dot(xn_bf, wq_ref[...], preferred_element_type=jnp.float32)
         + bq_ref[...]).astype(jnp.bfloat16)
    k = (jnp.dot(xn_bf, wk_ref[...], preferred_element_type=jnp.float32)
         + bk_ref[...]).astype(jnp.bfloat16)
    v = (jnp.dot(xn_bf, wv_ref[...], preferred_element_type=jnp.float32)
         + bv_ref[...]).astype(jnp.bfloat16)

    # ---- multi-head attention ----
    if n_heads == 1:
        # Lane (last) dim unchanged -> cheap leading-dim split, no relayout.
        qh = q.reshape(bt, L, C)
        kh = k.reshape(bt, L, C)
        vh = v.reshape(bt, L, C)
    else:
        # Exact torch `.view(bs*n_heads, L, ch)` flat reinterpretation.
        qh = q.reshape(bt * n_heads, L, ch)
        kh = k.reshape(bt * n_heads, L, ch)
        vh = v.reshape(bt * n_heads, L, ch)

    # TODO(synk): switch to a K-block online-softmax (flash) loop once
    # bt*n_heads*L*L*4 bytes exceeds a few MiB (halve that threshold on v7x).
    s = jnp.einsum('hqc,hkc->hqk', qh, kh,
                   preferred_element_type=jnp.float32)          # (H, L, L) f32
    m = jnp.max(s, axis=-1, keepdims=True)
    p = jnp.exp(s - m)
    denom = jnp.sum(p, axis=-1, keepdims=True)
    p = p * pl.reciprocal(denom, approx=False)                   # exact recip
    a = jnp.einsum('hqk,hkc->hqc', p.astype(jnp.bfloat16), vh,
                   preferred_element_type=jnp.float32)           # (H, L, ch)
    a = a.reshape(R, C)

    # ---- output projection + residual (residual is the normalized x) ----
    out = jnp.dot(a.astype(jnp.bfloat16), wout_ref[...],
                  preferred_element_type=jnp.float32) + bout_ref[...]
    o_ref[...] = (out + xn_ref[...]).reshape(bt, L, C).astype(o_ref.dtype)


# --------------------------------------------------------------------------- #
# Generation-aware sizing helpers
# --------------------------------------------------------------------------- #
def _chip_config():
    """Return (vmem_capacity_bytes, need_two_grid_steps, mxu_m_align, target_rows)."""
    cap = None
    try:
        cap = int(getattr(pltpu.get_tpu_info(), "vmem_capacity_bytes", 0)) or None
    except Exception:
        cap = None
    kind = ""
    try:
        kind = jax.devices()[0].device_kind.lower()
    except Exception:
        pass
    if "v7" in kind:                       # 2 TCs/chip, 64 MiB VMEM per TC
        return (cap or 64 * 1024 * 1024), True, 256, 512
    if ("v5 lite" in kind) or ("v5e" in kind) or ("v5lite" in kind):
        return (cap or 128 * 1024 * 1024), False, 128, 1024   # 4x128x128 MXU
    two_tc = ("v4" in kind) or ("v5p" in kind)                 # megacore parts
    return (cap or 128 * 1024 * 1024), two_tc, 256, 1024      # v6e default


def _footprint_bytes(bt, L, C, n_heads, x_itemsize):
    """Rough per-step VMEM footprint (with headroom for compiler temps)."""
    f32 = 4
    R = bt * L
    H = bt * n_heads
    io = 2 * R * C * x_itemsize * 2                  # x + out, double-buffered
    weights = 4 * C * C * 2 + 9 * C * f32            # bf16 W, f32 LN/biases (x1)
    work = (R * C                                    # xn scratch
            + 3 * R * C                              # q, k, v
            + 2 * H * L * L                          # scores + exp(scores)
            + 2 * R * C) * f32                       # attn out + projection out
    return io + weights + 2 * work


def _default_batch_tile(bs, L, C, n_heads, x_itemsize, *,
                        target_rows, m_align, safe_cap, need_two_steps):
    """Largest divisor of bs whose tile fits the VMEM budget; prefer bt*L
    aligned to the MXU M; keep >=2 grid steps only on multi-TC chips."""
    divisors = [bt for bt in range(1, bs + 1) if bs % bt == 0]
    fitting = [bt for bt in divisors
               if bt * L <= target_rows
               and _footprint_bytes(bt, L, C, n_heads, x_itemsize) <= safe_cap]
    if not fitting:
        fitting = [1]

    def pick(cands):
        aligned = [bt for bt in cands if (bt * L) % m_align == 0]
        return max(aligned) if aligned else max(cands)

    best = pick(fitting)
    if need_two_steps and bs > 1 and bs // best < 2:
        smaller = [bt for bt in fitting if bs // bt >= 2]
        if smaller:
            best = pick(smaller)
    return best


def _vmem_limit_bytes(bt, L, C, n_heads, x_itemsize, safe_cap):
    est = _footprint_bytes(bt, L, C, n_heads, x_itemsize)
    return int(min(max(est, 16 * 1024 * 1024), safe_cap))


# --------------------------------------------------------------------------- #
# Param preparation + wrapper
# --------------------------------------------------------------------------- #
def prepare_params(params, n_heads=1):
    """One-time transform: split W_qkv/b_qkv into Q/K/V pieces, fold the QK
    scale into the Q/K pieces, cast matmul weights to bf16 (MXU operands)."""
    gamma, beta, wqkv, bqkv, wout, bout = params
    C = wout.shape[0]
    ch = C // n_heads
    scale = jnp.float32(1.0 / math.sqrt(math.sqrt(ch)))
    wq = (wqkv[:, 0 * C:1 * C] * scale).astype(jnp.bfloat16)
    wk = (wqkv[:, 1 * C:2 * C] * scale).astype(jnp.bfloat16)
    wv = wqkv[:, 2 * C:3 * C].astype(jnp.bfloat16)
    bq = (bqkv[:, 0 * C:1 * C] * scale).astype(jnp.float32)
    bk = (bqkv[:, 1 * C:2 * C] * scale).astype(jnp.float32)
    bv = bqkv[:, 2 * C:3 * C].astype(jnp.float32)
    return (gamma.astype(jnp.float32), beta.astype(jnp.float32),
            wq, wk, wv, bq, bk, bv,
            wout.astype(jnp.bfloat16), bout.astype(jnp.float32))


def attention_block(x, prepared_params, n_heads=1, batch_tile=None,
                    vmem_limit_bytes=None):
    gamma, beta, wq, wk, wv, bq, bk, bv, wout, bout = prepared_params
    bs, L, C = x.shape
    assert C % n_heads == 0
    itemsize = jnp.dtype(x.dtype).itemsize

    cap, need_two_steps, m_align, target_rows = _chip_config()
    safe_cap = int(0.75 * cap)           # ~48 MiB on v7x, ~96 MiB on v5e/v6e
    if batch_tile is None:
        bt = _default_batch_tile(bs, L, C, n_heads, itemsize,
                                 target_rows=target_rows, m_align=m_align,
                                 safe_cap=safe_cap,
                                 need_two_steps=need_two_steps)
    else:
        bt = batch_tile
    assert bs % bt == 0
    if vmem_limit_bytes is None:
        vmem_limit_bytes = _vmem_limit_bytes(bt, L, C, n_heads, itemsize, safe_cap)

    H = bs * n_heads
    ch = C // n_heads
    cost = pl.CostEstimate(
        flops=int(2 * bs * L * C * 3 * C          # QKV projections
                  + 2 * 2 * H * L * L * ch        # scores + attn @ V
                  + 2 * bs * L * C * C),          # output projection
        transcendentals=int(H * L * L + H * L + bs * L),
        bytes_accessed=int(2 * bs * L * C * itemsize
                           + 4 * C * C * 2 + 9 * C * 4))

    kernel = functools.partial(attention_block_kernel, n_heads=n_heads)
    # Constant operands: whole-array, single-buffered, resident in VMEM.
    vmem_const = pl.BlockSpec(memory_space=pltpu.MemorySpace.VMEM)
    return pl.pallas_call(
        kernel,
        out_shape=jax.ShapeDtypeStruct((bs, L, C), x.dtype),
        grid=(bs // bt,),
        in_specs=[pl.BlockSpec((bt, L, C), lambda b: (b, 0, 0))]   # x batch tile
                 + [vmem_const] * 10,                              # params
        out_specs=pl.BlockSpec((bt, L, C), lambda b: (b, 0, 0)),
        scratch_shapes=[pltpu.VMEM((bt * L, C), jnp.float32)],     # xn residual
        compiler_params=pltpu.CompilerParams(
            dimension_semantics=("parallel",),
            vmem_limit_bytes=vmem_limit_bytes),
        cost_estimate=cost,
    )(x, gamma, beta, wq, wk, wv, bq, bk, bv, wout, bout)


# --------------------------------------------------------------------------- #
# Params + pure-JAX reference (transcription of the PyTorch forward)
# --------------------------------------------------------------------------- #
def init_params(key, C):
    k1, k2, k3, k4 = jax.random.split(key, 4)
    gamma = jnp.ones((1, C), jnp.float32)      # nn.LayerNorm default affine
    beta = jnp.zeros((1, C), jnp.float32)
    bound = 1.0 / math.sqrt(C)                 # nn.Linear-style uniform bound
    wqkv = jax.random.uniform(k1, (C, 3 * C), jnp.float32, -bound, bound)
    bqkv = jax.random.uniform(k2, (1, 3 * C), jnp.float32, -bound, bound)
    # zero_module(to_out) would make these zeros; random here so the attention
    # path produces non-trivial, verifiable values (zero-init checked in main).
    wout = jax.random.uniform(k3, (C, C), jnp.float32, -0.2, 0.2)
    bout = jax.random.uniform(k4, (1, C), jnp.float32, -0.1, 0.1)
    return gamma, beta, wqkv, bqkv, wout, bout


def ref_forward(x, params, n_heads=1):
    """Pure-JAX f32 transcription of the PyTorch forward (for verification)."""
    gamma, beta, wqkv, bqkv, wout, bout = params
    bs, L, C = x.shape
    x = x.astype(jnp.float32)
    mean = x.mean(-1, keepdims=True)
    var = ((x - mean) ** 2).mean(-1, keepdims=True)
    xn = (x - mean) / jnp.sqrt(var + LN_EPS) * gamma[0] + beta[0]
    qkv = xn @ wqkv + bqkv[0]
    q, k, v = qkv[..., :C], qkv[..., C:2 * C], qkv[..., 2 * C:]
    ch = C // n_heads
    scale = 1.0 / math.sqrt(math.sqrt(ch))
    qh = (q * scale).reshape(bs * n_heads, L, ch)
    kh = (k * scale).reshape(bs * n_heads, L, ch)
    vh = v.reshape(bs * n_heads, L, ch)
    w = jnp.einsum('bqc,bkc->bqk', qh, kh)
    w = jax.nn.softmax(w, axis=-1)
    a = jnp.einsum('bqk,bkc->bqc', w, vh).reshape(bs, L, C)
    return a @ wout + bout[0] + xn


# --------------------------------------------------------------------------- #
if __name__ == "__main__":
    bs, L, C = 4, 16, 128     # lane-dense channel dim (>=128) per perf review
    n_heads = 1               # module default
    key = jax.random.PRNGKey(0)
    kx, kp = jax.random.split(key)
    x = jax.random.normal(kx, (bs, L, C), jnp.float32)
    raw_params = init_params(kp, C)
    prepped = prepare_params(raw_params, n_heads)

    # Random-to_out check (exercises the full attention path).
    out = jax.block_until_ready(attention_block(x, prepped, n_heads=n_heads))
    ref = ref_forward(x, raw_params, n_heads=n_heads)
    assert out.shape == (bs, L, C)
    max_err = float(jnp.max(jnp.abs(out - ref)))
    # bf16 MXU operands vs. exact-f32 reference.
    assert jnp.allclose(out, ref, rtol=5e-2, atol=5e-2), (
        f"max abs err = {max_err}")

    # PyTorch-init fidelity: zero_module(to_out) => output == LayerNorm(x).
    gamma, beta, wqkv, bqkv, wout, bout = raw_params
    zero_params = (gamma, beta, wqkv, bqkv,
                   jnp.zeros_like(wout), jnp.zeros_like(bout))
    out0 = jax.block_until_ready(
        attention_block(x, prepare_params(zero_params, n_heads),
                        n_heads=n_heads))
    ref0 = ref_forward(x, zero_params, n_heads=n_heads)
    assert jnp.allclose(out0, ref0, rtol=1e-5, atol=1e-5), (
        f"zero-init max abs err = {float(jnp.max(jnp.abs(out0 - ref0)))}")

    # bf16 I/O path (halves the only grid-scaling HBM traffic).
    xb = x.astype(jnp.bfloat16)
    outb = jax.block_until_ready(attention_block(xb, prepped, n_heads=n_heads))
    assert outb.dtype == jnp.bfloat16
    assert jnp.allclose(outb.astype(jnp.float32), ref, rtol=1e-1, atol=1e-1), (
        f"bf16 I/O max abs err = "
        f"{float(jnp.max(jnp.abs(outb.astype(jnp.float32) - ref)))}")

    print("KERNEL_OK")
</pallas_src>

<mosaic_0001>
module attributes {stable_mosaic.version = 11 : i64} {
  func.func @attention_block_kernel(%arg0: i32, %arg1: memref<4x16x128xf32, #tpu.memory_space<vmem>>, %arg2: memref<1x128xf32, #tpu.memory_space<vmem>>, %arg3: memref<1x128xf32, #tpu.memory_space<vmem>>, %arg4: memref<128x128xbf16, #tpu.memory_space<vmem>>, %arg5: memref<128x128xbf16, #tpu.memory_space<vmem>>, %arg6: memref<128x128xbf16, #tpu.memory_space<vmem>>, %arg7: memref<1x128xf32, #tpu.memory_space<vmem>>, %arg8: memref<1x128xf32, #tpu.memory_space<vmem>>, %arg9: memref<1x128xf32, #tpu.memory_space<vmem>>, %arg10: memref<128x128xbf16, #tpu.memory_space<vmem>>, %arg11: memref<1x128xf32, #tpu.memory_space<vmem>>, %arg12: memref<4x16x128xf32, #tpu.memory_space<vmem>>, %arg13: memref<64x128xf32, #tpu.memory_space<vmem>>) attributes {dimension_semantics = [#tpu.dimension_semantics<parallel>], iteration_bounds = array<i64: 1>, scalar_prefetch = 0 : i64, scratch_operands = 1 : i64, tpu.core_type = #tpu.core_type<tc>, window_params = [{transform_indices = @transform_0, window_bounds = array<i64: 4, 16, 128>}, {pipeline_mode = #tpu.pipeline_mode<synchronous>, transform_indices = @transform_1, window_bounds = array<i64: 1, 128>}, {pipeline_mode = #tpu.pipeline_mode<synchronous>, transform_indices = @transform_2, window_bounds = array<i64: 1, 128>}, {pipeline_mode = #tpu.pipeline_mode<synchronous>, transform_indices = @transform_3, window_bounds = array<i64: 128, 128>}, {pipeline_mode = #tpu.pipeline_mode<synchronous>, transform_indices = @transform_4, window_bounds = array<i64: 128, 128>}, {pipeline_mode = #tpu.pipeline_mode<synchronous>, transform_indices = @transform_5, window_bounds = array<i64: 128, 128>}, {pipeline_mode = #tpu.pipeline_mode<synchronous>, transform_indices = @transform_6, window_bounds = array<i64: 1, 128>}, {pipeline_mode = #tpu.pipeline_mode<synchronous>, transform_indices = @transform_7, window_bounds = array<i64: 1, 128>}, {pipeline_mode = #tpu.pipeline_mode<synchronous>, transform_indices = @transform_8, window_bounds = array<i64: 1, 128>}, {pipeline_mode = #tpu.pipeline_mode<synchronous>, transform_indices = @transform_9, window_bounds = array<i64: 128, 128>}, {pipeline_mode = #tpu.pipeline_mode<synchronous>, transform_indices = @transform_10, window_bounds = array<i64: 1, 128>}, {transform_indices = @transform_11, window_bounds = array<i64: 4, 16, 128>}]} {
    %c0 = arith.constant 0 : index
    %c0_0 = arith.constant 0 : index
    %c0_1 = arith.constant 0 : index
    %0 = vector.load %arg1[%c0, %c0_0, %c0_1] : memref<4x16x128xf32, #tpu.memory_space<vmem>>, vector<4x16x128xf32>
    %1 = vector.shape_cast %0 : vector<4x16x128xf32> to vector<64x128xf32>
    %cst = arith.constant dense<0.000000e+00> : vector<64xf32>
    %2 = vector.multi_reduction <add>, %1, %cst [1] : vector<64x128xf32> to vector<64xf32>
    %3 = vector.shape_cast %2 : vector<64xf32> to vector<64x1xf32>
    %cst_2 = arith.constant 1.280000e+02 : f32
    %4 = vector.broadcast %cst_2 : f32 to vector<64x1xf32>
    %5 = arith.divf %3, %4 : vector<64x1xf32>
    %6 = vector.broadcast %5 : vector<64x1xf32> to vector<64x128xf32>
    %7 = arith.subf %1, %6 : vector<64x128xf32>
    %8 = arith.mulf %7, %7 : vector<64x128xf32>
    %cst_3 = arith.constant dense<0.000000e+00> : vector<64xf32>
    %9 = vector.multi_reduction <add>, %8, %cst_3 [1] : vector<64x128xf32> to vector<64xf32>
    %10 = vector.shape_cast %9 : vector<64xf32> to vector<64x1xf32>
    %cst_4 = arith.constant 1.280000e+02 : f32
    %11 = vector.broadcast %cst_4 : f32 to vector<64x1xf32>
    %12 = arith.divf %10, %11 : vector<64x1xf32>
    %13 = vector.broadcast %5 : vector<64x1xf32> to vector<64x128xf32>
    %14 = arith.subf %1, %13 : vector<64x128xf32>
    %cst_5 = arith.constant 9.99999974E-6 : f32
    %15 = vector.broadcast %cst_5 : f32 to vector<64x1xf32>
    %16 = arith.addf %12, %15 : vector<64x1xf32>
    %17 = math.rsqrt %16 : vector<64x1xf32>
    %18 = vector.broadcast %17 : vector<64x1xf32> to vector<64x128xf32>
    %19 = arith.mulf %14, %18 : vector<64x128xf32>
    %c0_6 = arith.constant 0 : index
    %c0_7 = arith.constant 0 : index
    %20 = vector.load %arg2[%c0_6, %c0_7] : memref<1x128xf32, #tpu.memory_space<vmem>>, vector<1x128xf32>
    %21 = vector.broadcast %20 : vector<1x128xf32> to vector<64x128xf32>
    %22 = arith.mulf %19, %21 : vector<64x128xf32>
    %c0_8 = arith.constant 0 : index
    %c0_9 = arith.constant 0 : index
    %23 = vector.load %arg3[%c0_8, %c0_9] : memref<1x128xf32, #tpu.memory_space<vmem>>, vector<1x128xf32>
    %24 = vector.broadcast %23 : vector<1x128xf32> to vector<64x128xf32>
    %25 = arith.addf %22, %24 : vector<64x128xf32>
    %c0_10 = arith.constant 0 : index
    %c0_11 = arith.constant 0 : index
    %26 = vector.load %arg13[%c0_10, %c0_11] : memref<64x128xf32, #tpu.memory_space<vmem>>, vector<64x128xf32>
    tpu.vector_store %arg13[%c0_10, %c0_11], %25 {strides = array<i32>} : memref<64x128xf32, #tpu.memory_space<vmem>>, vector<64x128xf32>,
    %27 = arith.truncf %25 : vector<64x128xf32> to vector<64x128xbf16>
    %c0_12 = arith.constant 0 : index
    %c0_13 = arith.constant 0 : index
    %28 = vector.load %arg4[%c0_12, %c0_13] : memref<128x128xbf16, #tpu.memory_space<vmem>>, vector<128x128xbf16>
    %cst_14 = arith.constant dense<0.000000e+00> : vector<64x128xf32>
    %29 = tpu.matmul %27, %28, %cst_14 {dimension_numbers = #tpu.dot_dimension_numbers<[1], [0], [0], [1], [0, 0, 1, 1], [], []>} : vector<64x128xbf16>, vector<128x128xbf16>, vector<64x128xf32> -> vector<64x128xf32>
    %c0_15 = arith.constant 0 : index
    %c0_16 = arith.constant 0 : index
    %30 = vector.load %arg7[%c0_15, %c0_16] : memref<1x128xf32, #tpu.memory_space<vmem>>, vector<1x128xf32>
    %31 = vector.broadcast %30 : vector<1x128xf32> to vector<64x128xf32>
    %32 = arith.addf %29, %31 : vector<64x128xf32>
    %33 = arith.truncf %32 : vector<64x128xf32> to vector<64x128xbf16>
    %c0_17 = arith.constant 0 : index
    %c0_18 = arith.constant 0 : index
    %34 = vector.load %arg5[%c0_17, %c0_18] : memref<128x128xbf16, #tpu.memory_space<vmem>>, vector<128x128xbf16>
    %cst_19 = arith.constant dense<0.000000e+00> : vector<64x128xf32>
    %35 = tpu.matmul %27, %34, %cst_19 {dimension_numbers = #tpu.dot_dimension_numbers<[1], [0], [0], [1], [0, 0, 1, 1], [], []>} : vector<64x128xbf16>, vector<128x128xbf16>, vector<64x128xf32> -> vector<64x128xf32>
    %c0_20 = arith.constant 0 : index
    %c0_21 = arith.constant 0 : index
    %36 = vector.load %arg8[%c0_20, %c0_21] : memref<1x128xf32, #tpu.memory_space<vmem>>, vector<1x128xf32>
    %37 = vector.broadcast %36 : vector<1x128xf32> to vector<64x128xf32>
    %38 = arith.addf %35, %37 : vector<64x128xf32>
    %39 = arith.truncf %38 : vector<64x128xf32> to vector<64x128xbf16>
    %c0_22 = arith.constant 0 : index
    %c0_23 = arith.constant 0 : index
    %40 = vector.load %arg6[%c0_22, %c0_23] : memref<128x128xbf16, #tpu.memory_space<vmem>>, vector<128x128xbf16>
    %cst_24 = arith.constant dense<0.000000e+00> : vector<64x128xf32>
    %41 = tpu.matmul %27, %40, %cst_24 {dimension_numbers = #tpu.dot_dimension_numbers<[1], [0], [0], [1], [0, 0, 1, 1], [], []>} : vector<64x128xbf16>, vector<128x128xbf16>, vector<64x128xf32> -> vector<64x128xf32>
    %c0_25 = arith.constant 0 : index
    %c0_26 = arith.constant 0 : index
    %42 = vector.load %arg9[%c0_25, %c0_26] : memref<1x128xf32, #tpu.memory_space<vmem>>, vector<1x128xf32>
    %43 = vector.broadcast %42 : vector<1x128xf32> to vector<64x128xf32>
    %44 = arith.addf %41, %43 : vector<64x128xf32>
    %45 = arith.truncf %44 : vector<64x128xf32> to vector<64x128xbf16>
    %46 = vector.shape_cast %33 : vector<64x128xbf16> to vector<4x16x128xbf16>
    %47 = vector.shape_cast %39 : vector<64x128xbf16> to vector<4x16x128xbf16>
    %48 = vector.shape_cast %45 : vector<64x128xbf16> to vector<4x16x128xbf16>
    "tpu.trace_start"() <{level = 10 : i32, message = "hqc,hkc->hqk"}> : () -> ()
    %cst_27 = arith.constant dense<0.000000e+00> : vector<4x16x16xf32>
    %49 = tpu.matmul %46, %47, %cst_27 {dimension_numbers = #tpu.dot_dimension_numbers<[2], [2], [1], [1], [0, 0, 0, 1, 1, 1], [0], [0]>} : vector<4x16x128xbf16>, vector<4x16x128xbf16>, vector<4x16x16xf32> -> vector<4x16x16xf32>
    "tpu.trace_stop"() : () -> ()
    %cst_28 = arith.constant dense<0xFF800000> : vector<4x16xf32>
    %50 = vector.multi_reduction <maximumf>, %49, %cst_28 [2] : vector<4x16x16xf32> to vector<4x16xf32>
    %51 = vector.shape_cast %50 : vector<4x16xf32> to vector<4x16x1xf32>
    %52 = vector.broadcast %51 : vector<4x16x1xf32> to vector<4x16x16xf32>
    %53 = arith.subf %49, %52 : vector<4x16x16xf32>
    %54 = math.exp %53 : vector<4x16x16xf32>
    %cst_29 = arith.constant dense<0.000000e+00> : vector<4x16xf32>
    %55 = vector.multi_reduction <add>, %54, %cst_29 [2] : vector<4x16x16xf32> to vector<4x16xf32>
    %56 = vector.shape_cast %55 : vector<4x16xf32> to vector<4x16x1xf32>
    %57 = tpu.reciprocal %56 : vector<4x16x1xf32> -> vector<4x16x1xf32>
    %58 = vector.broadcast %57 : vector<4x16x1xf32> to vector<4x16x16xf32>
    %59 = arith.mulf %54, %58 : vector<4x16x16xf32>
    %60 = arith.truncf %59 : vector<4x16x16xf32> to vector<4x16x16xbf16>
    "tpu.trace_start"() <{level = 10 : i32, message = "hqk,hkc->hqc"}> : () -> ()
    %cst_30 = arith.constant dense<0.000000e+00> : vector<4x16x128xf32>
    %61 = tpu.matmul %60, %48, %cst_30 {dimension_numbers = #tpu.dot_dimension_numbers<[2], [1], [1], [2], [0, 0, 0, 1, 1, 2], [0], [0]>} : vector<4x16x16xbf16>, vector<4x16x128xbf16>, vector<4x16x128xf32> -> vector<4x16x128xf32>
    "tpu.trace_stop"() : () -> ()
    %62 = vector.shape_cast %61 : vector<4x16x128xf32> to vector<64x128xf32>
    %63 = arith.truncf %62 : vector<64x128xf32> to vector<64x128xbf16>
    %c0_31 = arith.constant 0 : index
    %c0_32 = arith.constant 0 : index
    %64 = vector.load %arg10[%c0_31, %c0_32] : memref<128x128xbf16, #tpu.memory_space<vmem>>, vector<128x128xbf16>
    %cst_33 = arith.constant dense<0.000000e+00> : vector<64x128xf32>
    %65 = tpu.matmul %63, %64, %cst_33 {dimension_numbers = #tpu.dot_dimension_numbers<[1], [0], [0], [1], [0, 0, 1, 1], [], []>} : vector<64x128xbf16>, vector<128x128xbf16>, vector<64x128xf32> -> vector<64x128xf32>
    %c0_34 = arith.constant 0 : index
    %c0_35 = arith.constant 0 : index
    %66 = vector.load %arg11[%c0_34, %c0_35] : memref<1x128xf32, #tpu.memory_space<vmem>>, vector<1x128xf32>
    %67 = vector.broadcast %66 : vector<1x128xf32> to vector<64x128xf32>
    %68 = arith.addf %65, %67 : vector<64x128xf32>
    %c0_36 = arith.constant 0 : index
    %c0_37 = arith.constant 0 : index
    %69 = vector.load %arg13[%c0_36, %c0_37] : memref<64x128xf32, #tpu.memory_space<vmem>>, vector<64x128xf32>
    %70 = arith.addf %68, %69 : vector<64x128xf32>
    %71 = vector.shape_cast %70 : vector<64x128xf32> to vector<4x16x128xf32>
    %c0_38 = arith.constant 0 : index
    %c0_39 = arith.constant 0 : index
    %c0_40 = arith.constant 0 : index
    %72 = vector.load %arg12[%c0_38, %c0_39, %c0_40] : memref<4x16x128xf32, #tpu.memory_space<vmem>>, vector<4x16x128xf32>
    tpu.vector_store %arg12[%c0_38, %c0_39, %c0_40], %71 {strides = array<i32>} : memref<4x16x128xf32, #tpu.memory_space<vmem>>, vector<4x16x128xf32>,
    return
  }
  func.func @transform_0(%arg0: i32) -> (i32, i32, i32) {
    %c0_i32 = arith.constant 0 : i32
    %c0_i32_0 = arith.constant 0 : i32
    %c0_i32_1 = arith.constant 0 : i32
    return %arg0, %c0_i32, %c0_i32_0 : i32, i32, i32
  }
  func.func @transform_1(%arg0: i32) -> (i32, i32) {
    %c0_i32 = arith.constant 0 : i32
    %c0_i32_0 = arith.constant 0 : i32
    %c0_i32_1 = arith.constant 0 : i32
    return %c0_i32, %c0_i32_0 : i32, i32
  }
  func.func @transform_2(%arg0: i32) -> (i32, i32) {
    %c0_i32 = arith.constant 0 : i32
    %c0_i32_0 = arith.constant 0 : i32
    %c0_i32_1 = arith.constant 0 : i32
    return %c0_i32, %c0_i32_0 : i32, i32
  }
  func.func @transform_3(%arg0: i32) -> (i32, i32) {
    %c0_i32 = arith.constant 0 : i32
    %c0_i32_0 = arith.constant 0 : i32
    %c0_i32_1 = arith.constant 0 : i32
    return %c0_i32, %c0_i32_0 : i32, i32
  }
  func.func @transform_4(%arg0: i32) -> (i32, i32) {
    %c0_i32 = arith.constant 0 : i32
    %c0_i32_0 = arith.constant 0 : i32
    %c0_i32_1 = arith.constant 0 : i32
    return %c0_i32, %c0_i32_0 : i32, i32
  }
  func.func @transform_5(%arg0: i32) -> (i32, i32) {
    %c0_i32 = arith.constant 0 : i32
    %c0_i32_0 = arith.constant 0 : i32
    %c0_i32_1 = arith.constant 0 : i32
    return %c0_i32, %c0_i32_0 : i32, i32
  }
  func.func @transform_6(%arg0: i32) -> (i32, i32) {
    %c0_i32 = arith.constant 0 : i32
    %c0_i32_0 = arith.constant 0 : i32
    %c0_i32_1 = arith.constant 0 : i32
    return %c0_i32, %c0_i32_0 : i32, i32
  }
  func.func @transform_7(%arg0: i32) -> (i32, i32) {
    %c0_i32 = arith.constant 0 : i32
    %c0_i32_0 = arith.constant 0 : i32
    %c0_i32_1 = arith.constant 0 : i32
    return %c0_i32, %c0_i32_0 : i32, i32
  }
  func.func @transform_8(%arg0: i32) -> (i32, i32) {
    %c0_i32 = arith.constant 0 : i32
    %c0_i32_0 = arith.constant 0 : i32
    %c0_i32_1 = arith.constant 0 : i32
    return %c0_i32, %c0_i32_0 : i32, i32
  }
  func.func @transform_9(%arg0: i32) -> (i32, i32) {
    %c0_i32 = arith.constant 0 : i32
    %c0_i32_0 = arith.constant 0 : i32
    %c0_i32_1 = arith.constant 0 : i32
    return %c0_i32, %c0_i32_0 : i32, i32
  }
  func.func @transform_10(%arg0: i32) -> (i32, i32) {
    %c0_i32 = arith.constant 0 : i32
    %c0_i32_0 = arith.constant 0 : i32
    %c0_i32_1 = arith.constant 0 : i32
    return %c0_i32, %c0_i32_0 : i32, i32
  }
  func.func @transform_11(%arg0: i32) -> (i32, i32, i32) {
    %c0_i32 = arith.constant 0 : i32
    %c0_i32_0 = arith.constant 0 : i32
    %c0_i32_1 = arith.constant 0 : i32
    return %arg0, %c0_i32, %c0_i32_0 : i32, i32, i32
  }
}

</mosaic_0001>

<llo_original>
// kernel: tpu_custom_call.1
$region0: #{tpu_custom_call.1}
  #allocation0 [shape = 'u32[]', space=smem, size = 0x4, offset = 0x4, fixed_abs, tag = 'smem constant byte address 0x4 - core index']
  #allocation1 [shape = 'u32[144,128]{1,0:T(1,128)}', space=vmem, size = 0x12000, scoped, tag = 'internal scratch']
  #allocation2 [shape = 'f32[64,128]{1,0:T(8,128)}', space=vmem, size = 0x8000, scoped, tag = 'scratch operand']
  %s0 = inlined_call_operand.hbm [shape: f32[4,16,128], index: 0, kind: input, shape index: {}]
  %s1 = inlined_call_operand.vmem [shape: f32[1,128], index: 1, kind: input, shape index: {}]
  %s2 = inlined_call_operand.vmem [shape: f32[1,128], index: 2, kind: input, shape index: {}]
  %s3 = inlined_call_operand.hbm [shape: bf16[128,128], index: 3, kind: input, shape index: {}]
  %s4 = inlined_call_operand.hbm [shape: bf16[128,128], index: 4, kind: input, shape index: {}]
  %s5 = inlined_call_operand.hbm [shape: bf16[128,128], index: 5, kind: input, shape index: {}]
  %s6 = inlined_call_operand.vmem [shape: f32[1,128], index: 6, kind: input, shape index: {}]
  %s7 = inlined_call_operand.vmem [shape: f32[1,128], index: 7, kind: input, shape index: {}]
  %s8 = inlined_call_operand.vmem [shape: f32[1,128], index: 8, kind: input, shape index: {}]
  %s9 = inlined_call_operand.hbm [shape: bf16[128,128], index: 9, kind: input, shape index: {}]
  %s10 = inlined_call_operand.vmem [shape: f32[1,128], index: 10, kind: input, shape index: {}]
  %s11 = inlined_call_operand.hbm [shape: f32[4,16,128], index: 11, kind: output, shape index: {}]
  %s12 = sld [smem:[#allocation0]]
  $region74: #{tpu_custom_call.1} parent=0
    _
  %s14 = ssub.s32 1, %s12
  %s15 = scalar_select 0, %s14, %s12
  $region1: #{tpu_custom_call.1} parent=0
    #allocation3 [shape = 'u8[32768]{0}', space=vmem, size = 0x8000, scoped, tag = 'input window, operand 0, single buffered']
    #allocation4 [shape = 's32[1]{0}', space=sflag, size = 0x4, scoped, tag = 'scoped memory for tpu_custom_call.1']
    #allocation5 [shape = 's32[1]{0}', space=sflag, size = 0x4, scoped, tag = 'scoped memory for tpu_custom_call.1']
    #allocation6 [shape = 'u8[32768]{0}', space=vmem, size = 0x8000, scoped, tag = 'input window, operand 3, single buffered']
    #allocation7 [shape = 's32[1]{0}', space=sflag, size = 0x4, scoped, tag = 'scoped memory for tpu_custom_call.1']
    #allocation8 [shape = 'u8[32768]{0}', space=vmem, size = 0x8000, scoped, tag = 'input window, operand 4, single buffered']
    #allocation9 [shape = 'u8[32768]{0}', space=vmem, size = 0x8000, scoped, tag = 'input window, operand 5, single buffered']
    #allocation10 [shape = 's32[1]{0}', space=sflag, size = 0x4, scoped, tag = 'scoped memory for tpu_custom_call.1']
    #allocation11 [shape = 'u8[32768]{0}', space=vmem, size = 0x8000, scoped, tag = 'input window, operand 9, single buffered']
    #allocation12 [shape = 'u8[32768]{0}', space=vmem, size = 0x8000, scoped, tag = 'output window, operand 0, single buffered']
    %16 = vsyncpa [#allocation4], 0
    %17 = vsyncpa [#allocation7], 0
    %18 = vsyncpa [#allocation10], 0
    %19 = vsyncpa [#allocation5], 0
    // Predicated region
    $region2: #{tpu_custom_call.1} parent=1 // pred_check
      _
    $region3: #{tpu_custom_call.1} parent=1 // pred_check_branch
      %21 = sbr.rel (0) target = $region5
    $region4: #{tpu_custom_call.1} parent=1 // pred_region
      %s23 = ssub.s32 1024, 1024
      %24 = vsyncadd [#allocation4], %s23
      %s25 = sshll.u32 [#allocation3], 4
      %s26 = int_to_ptr.vmem [resolvable:$true] %s25
      %31 = dma.hbm_to_vmem [thread:$0]  %s0, 1024, %s26, [#allocation4], 128, 128, 8
    $region5: #{tpu_custom_call.1} parent=1 // pred_fallthru
      _
    // Predicated region
    $region6: #{tpu_custom_call.1} parent=1 // pred_check
      _
    $region7: #{tpu_custom_call.1} parent=1 // pred_check_branch
      %33 = sbr.rel (0) target = $region9
    $region8: #{tpu_custom_call.1} parent=1 // pred_region
      _
    $region9: #{tpu_custom_call.1} parent=1 // pred_fallthru
      _
    // Predicated region
    $region10: #{tpu_custom_call.1} parent=1 // pred_check
      _
    $region11: #{tpu_custom_call.1} parent=1 // pred_check_branch
      %35 = sbr.rel (0) target = $region13
    $region12: #{tpu_custom_call.1} parent=1 // pred_region
      _
    $region13: #{tpu_custom_call.1} parent=1 // pred_fallthru
      _
    // Predicated region
    $region14: #{tpu_custom_call.1} parent=1 // pred_check
      _
    $region15: #{tpu_custom_call.1} parent=1 // pred_check_branch
      %37 = sbr.rel (0) target = $region17
    $region16: #{tpu_custom_call.1} parent=1 // pred_region
      %s39 = ssub.s32 1024, 1024
      %40 = vsyncadd [#allocation7], %s39
      %s41 = sshll.u32 [#allocation6], 4
      %s42 = int_to_ptr.vmem [resolvable:$true] %s41
      %47 = dma.hbm_to_vmem [thread:$0]  %s3, 1024, %s42, [#allocation7], 64, 64, 4
    $region17: #{tpu_custom_call.1} parent=1 // pred_fallthru
      _
    // Predicated region
    $region18: #{tpu_custom_call.1} parent=1 // pred_check
      _
    $region19: #{tpu_custom_call.1} parent=1 // pred_check_branch
      %49 = sbr.rel (0) target = $region21
    $region20: #{tpu_custom_call.1} parent=1 // pred_region
      %s51 = ssub.s32 1024, 1024
      %52 = vsyncadd [#allocation7], %s51
      %s53 = sshll.u32 [#allocation8], 4
      %s54 = int_to_ptr.vmem [resolvable:$true] %s53
      %59 = dma.hbm_to_vmem [thread:$0]  %s4, 1024, %s54, [#allocation7], 64, 64, 4
    $region21: #{tpu_custom_call.1} parent=1 // pred_fallthru
      _
    // Predicated region
    $region22: #{tpu_custom_call.1} parent=1 // pred_check
      _
    $region23: #{tpu_custom_call.1} parent=1 // pred_check_branch
      %61 = sbr.rel (0) target = $region25
    $region24: #{tpu_custom_call.1} parent=1 // pred_region
      %s63 = ssub.s32 1024, 1024
      %64 = vsyncadd [#allocation10], %s63
      %s65 = sshll.u32 [#allocation9], 4
      %s66 = int_to_ptr.vmem [resolvable:$true] %s65
      %71 = dma.hbm_to_vmem [thread:$0]  %s5, 1024, %s66, [#allocation10], 64, 64, 4
    $region25: #{tpu_custom_call.1} parent=1 // pred_fallthru
      _
    // Predicated region
    $region26: #{tpu_custom_call.1} parent=1 // pred_check
      _
    $region27: #{tpu_custom_call.1} parent=1 // pred_check_branch
      %73 = sbr.rel (0) target = $region29
    $region28: #{tpu_custom_call.1} parent=1 // pred_region
      _
    $region29: #{tpu_custom_call.1} parent=1 // pred_fallthru
      _
    // Predicated region
    $region30: #{tpu_custom_call.1} parent=1 // pred_check
      _
    $region31: #{tpu_custom_call.1} parent=1 // pred_check_branch
      %75 = sbr.rel (0) target = $region33
    $region32: #{tpu_custom_call.1} parent=1 // pred_region
      _
    $region33: #{tpu_custom_call.1} parent=1 // pred_fallthru
      _
    // Predicated region
    $region34: #{tpu_custom_call.1} parent=1 // pred_check
      _
    $region35: #{tpu_custom_call.1} parent=1 // pred_check_branch
      %77 = sbr.rel (0) target = $region37
    $region36: #{tpu_custom_call.1} parent=1 // pred_region
      _
    $region37: #{tpu_custom_call.1} parent=1 // pred_fallthru
      _
    // Predicated region
    $region38: #{tpu_custom_call.1} parent=1 // pred_check
      _
    $region39: #{tpu_custom_call.1} parent=1 // pred_check_branch
      %79 = sbr.rel (0) target = $region41
    $region40: #{tpu_custom_call.1} parent=1 // pred_region
      %s81 = ssub.s32 1024, 1024
      %82 = vsyncadd [#allocation10], %s81
      %s83 = sshll.u32 [#allocation11], 4
      %s84 = int_to_ptr.vmem [resolvable:$true] %s83
      %89 = dma.hbm_to_vmem [thread:$0]  %s9, 1024, %s84, [#allocation10], 64, 64, 4
    $region41: #{tpu_custom_call.1} parent=1 // pred_fallthru
      _
    // Predicated region
    $region42: #{tpu_custom_call.1} parent=1 // pred_check
      _
    $region43: #{tpu_custom_call.1} parent=1 // pred_check_branch
      %91 = sbr.rel (0) target = $region45
    $region44: #{tpu_custom_call.1} parent=1 // pred_region
      _
    $region45: #{tpu_custom_call.1} parent=1 // pred_fallthru
      _
    // Predicated region
    $region46: #{tpu_custom_call.1} parent=1 // pred_check
      _
    $region47: #{tpu_custom_call.1} parent=1 // pred_check_branch
      %93 = sbr.rel (0) target = $region49
    $region48: #{tpu_custom_call.1} parent=1 // pred_region
      %94 = dma.done [#allocation4], 1024
    $region49: #{tpu_custom_call.1} parent=1 // pred_fallthru
      _
    // Predicated region
    $region50: #{tpu_custom_call.1} parent=1 // pred_check
      _
    $region51: #{tpu_custom_call.1} parent=1 // pred_check_branch
      %96 = sbr.rel (0) target = $region53
    $region52: #{tpu_custom_call.1} parent=1 // pred_region
      %97 = dma.done [#allocation7], 1024
    $region53: #{tpu_custom_call.1} parent=1 // pred_fallthru
      _
    // Predicated region
    $region54: #{tpu_custom_call.1} parent=1 // pred_check
      _
    $region55: #{tpu_custom_call.1} parent=1 // pred_check_branch
      %99 = sbr.rel (0) target = $region57
    $region56: #{tpu_custom_call.1} parent=1 // pred_region
      %100 = dma.done [#allocation7], 1024
    $region57: #{tpu_custom_call.1} parent=1 // pred_fallthru
      _
    // Predicated region
    $region58: #{tpu_custom_call.1} parent=1 // pred_check
      _
    $region59: #{tpu_custom_call.1} parent=1 // pred_check_branch
      %102 = sbr.rel (0) target = $region61
    $region60: #{tpu_custom_call.1} parent=1 // pred_region
      %103 = dma.done [#allocation10], 1024
    $region61: #{tpu_custom_call.1} parent=1 // pred_fallthru
      _
    // Predicated region
    $region62: #{tpu_custom_call.1} parent=1 // pred_check
      _
    $region63: #{tpu_custom_call.1} parent=1 // pred_check_branch
      %105 = sbr.rel (0) target = $region65
    $region64: #{tpu_custom_call.1} parent=1 // pred_region
      %106 = dma.done [#allocation10], 1024
    $region65: #{tpu_custom_call.1} parent=1 // pred_fallthru
      _
    %v108 = vld [vmem:[#allocation3] sm:$0xff]
    %v109 = vld [vmem:[#allocation3 + $0x8] sm:$0xff]
    %v110 = vld [vmem:[#allocation3 + $0x10] sm:$0xff]
    %v111 = vld [vmem:[#allocation3 + $0x18] sm:$0xff]
    %v112 = vld [vmem:[#allocation3 + $0x20] sm:$0xff]
    %v113 = vld [vmem:[#allocation3 + $0x28] sm:$0xff]
    %v114 = vld [vmem:[#allocation3 + $0x30] sm:$0xff]
    %v115 = vld [vmem:[#allocation3 + $0x38] sm:$0xff]
    %116 = vadd.xlane.f32.xlu0 %v108
    %v117 = vpop.xlane.xlu0 %116
    %118 = vadd.xlane.f32.xlu0 %v109
    %v119 = vpop.xlane.xlu0 %118
    %120 = vadd.xlane.f32.xlu0 %v110
    %v121 = vpop.xlane.xlu0 %120
    %122 = vadd.xlane.f32.xlu0 %v111
    %v123 = vpop.xlane.xlu0 %122
    %124 = vadd.xlane.f32.xlu0 %v112
    %v125 = vpop.xlane.xlu0 %124
    %126 = vadd.xlane.f32.xlu0 %v113
    %v127 = vpop.xlane.xlu0 %126
    %128 = vadd.xlane.f32.xlu0 %v114
    %v129 = vpop.xlane.xlu0 %128
    %130 = vadd.xlane.f32.xlu0 %v115
    %v131 = vpop.xlane.xlu0 %130
    %v132 = vrcp.pop 128.0
    %v133 = vmul.f32 %v117, %v132
    %v134 = vmul.f32 %v119, %v132
    %v135 = vmul.f32 %v121, %v132
    %v136 = vmul.f32 %v123, %v132
    %v137 = vmul.f32 %v125, %v132
    %v138 = vmul.f32 %v127, %v132
    %v139 = vmul.f32 %v129, %v132
    %v140 = vmul.f32 %v131, %v132
    %v141 = vsub.f32 %v108, %v133
    %v142 = vsub.f32 %v109, %v134
    %v143 = vsub.f32 %v110, %v135
    %v144 = vsub.f32 %v111, %v136
    %v145 = vsub.f32 %v112, %v137
    %v146 = vsub.f32 %v113, %v138
    %v147 = vsub.f32 %v114, %v139
    %v148 = vsub.f32 %v115, %v140
    %v149 = vmul.f32 %v141, %v141
    %v150 = vmul.f32 %v142, %v142
    %v151 = vmul.f32 %v143, %v143
    %v152 = vmul.f32 %v144, %v144
    %v153 = vmul.f32 %v145, %v145
    %v154 = vmul.f32 %v146, %v146
    %v155 = vmul.f32 %v147, %v147
    %v156 = vmul.f32 %v148, %v148
    %157 = vadd.xlane.f32.xlu0 %v149
    %v158 = vpop.xlane.xlu0 %157
    %159 = vadd.xlane.f32.xlu0 %v150
    %v160 = vpop.xlane.xlu0 %159
    %161 = vadd.xlane.f32.xlu0 %v151
    %v162 = vpop.xlane.xlu0 %161
    %163 = vadd.xlane.f32.xlu0 %v152
    %v164 = vpop.xlane.xlu0 %163
    %165 = vadd.xlane.f32.xlu0 %v153
    %v166 = vpop.xlane.xlu0 %165
    %167 = vadd.xlane.f32.xlu0 %v154
    %v168 = vpop.xlane.xlu0 %167
    %169 = vadd.xlane.f32.xlu0 %v155
    %v170 = vpop.xlane.xlu0 %169
    %171 = vadd.xlane.f32.xlu0 %v156
    %v172 = vpop.xlane.xlu0 %171
    %v173 = vmul.f32 %v158, %v132
    %v174 = vmul.f32 %v160, %v132
    %v175 = vmul.f32 %v162, %v132
    %v176 = vmul.f32 %v164, %v132
    %v177 = vmul.f32 %v166, %v132
    %v178 = vmul.f32 %v168, %v132
    %v179 = vmul.f32 %v170, %v132
    %v180 = vmul.f32 %v172, %v132
    %v181 = vadd.f32 %v173, 1e-05
    %v182 = vadd.f32 %v174, 1e-05
    %v183 = vadd.f32 %v175, 1e-05
    %v184 = vadd.f32 %v176, 1e-05
    %v185 = vadd.f32 %v177, 1e-05
    %v186 = vadd.f32 %v178, 1e-05
    %v187 = vadd.f32 %v179, 1e-05
    %v188 = vadd.f32 %v180, 1e-05
    %v189 = vrsqrt.pop %v181
    %v190 = vrsqrt.pop %v182
    %v191 = vrsqrt.pop %v183
    %v192 = vrsqrt.pop %v184
    %v193 = vrsqrt.pop %v185
    %v194 = vrsqrt.pop %v186
    %v195 = vrsqrt.pop %v187
    %v196 = vrsqrt.pop %v188
    %v197 = vmul.f32 %v141, %v189
    %v198 = vmul.f32 %v142, %v190
    %v199 = vmul.f32 %v143, %v191
    %v200 = vmul.f32 %v144, %v192
    %v201 = vmul.f32 %v145, %v193
    %v202 = vmul.f32 %v146, %v194
    %v203 = vmul.f32 %v147, %v195
    %v204 = vmul.f32 %v148, %v196
    %v205 = vld [vmem:[%s1] sm:$0x1]
    %v207 = vlaneseq
    %v208 = vshrl.u32 %v207, 7
    %v209 = vsub.s32 0, %v208
    %v210 = vrot.slane %v205, %v209
    %v212 = vmul.f32 %v197, %v210
    %v213 = vmul.f32 %v198, %v210
    %v214 = vmul.f32 %v199, %v210
    %v215 = vmul.f32 %v200, %v210
    %v216 = vmul.f32 %v201, %v210
    %v217 = vmul.f32 %v202, %v210
    %v218 = vmul.f32 %v203, %v210
    %v219 = vmul.f32 %v204, %v210
    %v220 = vld [vmem:[%s2] sm:$0x1]
    %v222 = vlaneseq
    %v223 = vshrl.u32 %v222, 7
    %v224 = vsub.s32 0, %v223
    %v225 = vrot.slane %v220, %v224
    %v227 = vadd.f32 %v212, %v225
    %v228 = vadd.f32 %v213, %v225
    %v229 = vadd.f32 %v214, %v225
    %v230 = vadd.f32 %v215, %v225
    %v231 = vadd.f32 %v216, %v225
    %v232 = vadd.f32 %v217, %v225
    %v233 = vadd.f32 %v218, %v225
    %v234 = vadd.f32 %v219, %v225
    %235 = vst [vmem:[#allocation2] sm:$0xff] %v227
    %236 = vst [vmem:[#allocation2 + $0x8] sm:$0xff] %v228
    %237 = vst [vmem:[#allocation2 + $0x10] sm:$0xff] %v229
    %238 = vst [vmem:[#allocation2 + $0x18] sm:$0xff] %v230
    %239 = vst [vmem:[#allocation2 + $0x20] sm:$0xff] %v231
    %240 = vst [vmem:[#allocation2 + $0x28] sm:$0xff] %v232
    %241 = vst [vmem:[#allocation2 + $0x30] sm:$0xff] %v233
    %242 = vst [vmem:[#allocation2 + $0x38] sm:$0xff] %v234
    %v243 = vpack.c.bf16 %v228, %v227
    %v244 = vpack.c.bf16 %v230, %v229
    %v245 = vpack.c.bf16 %v232, %v231
    %v246 = vpack.c.bf16 %v234, %v233
    %v247 = vld [vmem:[#allocation6] sm:$0xf]
    %v248 = vld [vmem:[#allocation6 + $0x4] sm:$0xf]
    %v249 = vld [vmem:[#allocation6 + $0x8] sm:$0xf]
    %v250 = vld [vmem:[#allocation6 + $0xc] sm:$0xf]
    %v251 = vld [vmem:[#allocation6 + $0x10] sm:$0xf]
    %v252 = vld [vmem:[#allocation6 + $0x14] sm:$0xf]
    %v253 = vld [vmem:[#allocation6 + $0x18] sm:$0xf]
    %v254 = vld [vmem:[#allocation6 + $0x1c] sm:$0xf]
    %v255 = vld [vmem:[#allocation6 + $0x20] sm:$0xf]
    %v256 = vld [vmem:[#allocation6 + $0x24] sm:$0xf]
    %v257 = vld [vmem:[#allocation6 + $0x28] sm:$0xf]
    %v258 = vld [vmem:[#allocation6 + $0x2c] sm:$0xf]
    %v259 = vld [vmem:[#allocation6 + $0x30] sm:$0xf]
    %v260 = vld [vmem:[#allocation6 + $0x34] sm:$0xf]
    %v261 = vld [vmem:[#allocation6 + $0x38] sm:$0xf]
    %v262 = vld [vmem:[#allocation6 + $0x3c] sm:$0xf]
    %v263 = vld [vmem:[%s6] sm:$0x1]
    %v265 = vlaneseq
    %v266 = vshrl.u32 %v265, 7
    %v267 = vsub.s32 0, %v266
    %v268 = vrot.slane %v263, %v267
    %v286 = vunpack.c.l.b16 %v247
    %v287 = vunpack.c.l.b16 %v248
    %v288 = vunpack.c.l.b16 %v249
    %v289 = vunpack.c.l.b16 %v250
    %v290 = vunpack.c.l.b16 %v251
    %v291 = vunpack.c.l.b16 %v252
    %v292 = vunpack.c.l.b16 %v253
    %v293 = vunpack.c.l.b16 %v254
    %v294 = vunpack.c.l.b16 %v255
    %v295 = vunpack.c.l.b16 %v256
    %v296 = vunpack.c.l.b16 %v257
    %v297 = vunpack.c.l.b16 %v258
    %v298 = vunpack.c.l.b16 %v259
    %v299 = vunpack.c.l.b16 %v260
    %v300 = vunpack.c.l.b16 %v261
    %v301 = vunpack.c.l.b16 %v262
    %v302 = vpack.c.b16 %v287, %v286
    %v303 = vpack.c.b16 %v289, %v288
    %v304 = vpack.c.b16 %v291, %v290
    %v305 = vpack.c.b16 %v293, %v292
    %v306 = vpack.c.b16 %v295, %v294
    %v307 = vpack.c.b16 %v297, %v296
    %v308 = vpack.c.b16 %v299, %v298
    %v309 = vpack.c.b16 %v301, %v300
    %318 = vmatprep.subr.bf16.mxu0 0
    %319 = vmatpush1.bf16.msra.mxu0 %v309
    %320 = vmatprep.subr.bf16.mxu0 0
    %321 = vmatpush1.bf16.msra.mxu0 %v308
    %322 = vmatprep.subr.bf16.mxu0 0
    %323 = vmatpush1.bf16.msra.mxu0 %v307
    %324 = vmatprep.subr.bf16.mxu0 0
    %325 = vmatpush1.bf16.msra.mxu0 %v306
    %326 = vmatprep.subr.bf16.mxu0 0
    %327 = vmatpush1.bf16.msra.mxu0 %v305
    %328 = vmatprep.subr.bf16.mxu0 0
    %329 = vmatpush1.bf16.msra.mxu0 %v304
    %330 = vmatprep.subr.bf16.mxu0 0
    %331 = vmatpush1.bf16.msra.mxu0 %v303
    %332 = vmatprep.subr.bf16.mxu0 0
    %333 = vmatpush1.bf16.msra.mxu0 %v302
    %334 = vmatprep.subr.bf16.mxu0 0
    %335 = vmatpush2.bf16.msra.mxu0 0
    %336 = vmatprep.subr.bf16.mxu0 0
    %337 = vmatpush2.bf16.msra.mxu0 0
    %338 = vmatprep.subr.bf16.mxu0 0
    %339 = vmatpush2.bf16.msra.mxu0 0
    %340 = vmatprep.subr.bf16.mxu0 0
    %341 = vmatpush2.bf16.msra.mxu0 0
    %342 = vmatprep.subr.bf16.mxu0 0
    %343 = vmatpush2.bf16.msra.mxu0 0
    %344 = vmatprep.subr.bf16.mxu0 0
    %345 = vmatpush2.bf16.msra.mxu0 0
    %346 = vmatprep.subr.bf16.mxu0 0
    %347 = vmatpush2.bf16.msra.mxu0 0
    %348 = vmatprep.subr.bf16.mxu0 0
    %349 = vmatpush2.bf16.msra.mxu0 0
    %350 = vmatprep.mubr.bf16.mxu0 0
    %351 = vmatmul.mubr.bf16.gmra.mxu0 %v243
    %v352 = vpop.f32.mrf.mxu0
    %v353 = vadd.f32 %v268, %v352
    %v354 = vpop.f32.mrf.mxu0
    %v355 = vpop.f32.mrf.mxu0
    %v356 = vadd.f32 %v268, %v355
    %v357 = vpop.f32.mrf.mxu0
    %358 = vmatprep.mubr.bf16.mxu0 0
    %359 = vmatmul.mubr.bf16.gmra.mxu0 %v244
    %v360 = vpop.f32.mrf.mxu0
    %v361 = vadd.f32 %v268, %v360
    %v362 = vpop.f32.mrf.mxu0
    %v363 = vpop.f32.mrf.mxu0
    %v364 = vadd.f32 %v268, %v363
    %v365 = vpop.f32.mrf.mxu0
    %366 = vmatprep.mubr.bf16.mxu0 0
    %367 = vmatmul.mubr.bf16.gmra.mxu0 %v245
    %v368 = vpop.f32.mrf.mxu0
    %v369 = vadd.f32 %v268, %v368
    %v370 = vpop.f32.mrf.mxu0
    %v371 = vpop.f32.mrf.mxu0
    %v372 = vadd.f32 %v268, %v371
    %v373 = vpop.f32.mrf.mxu0
    %374 = vmatprep.mubr.bf16.mxu0 0
    %375 = vmatmul.mubr.bf16.gmra.mxu0 %v246
    %v376 = vpop.f32.mrf.mxu0
    %v377 = vadd.f32 %v268, %v376
    %v378 = vpop.f32.mrf.mxu0
    %v379 = vpop.f32.mrf.mxu0
    %v380 = vadd.f32 %v268, %v379
    %v381 = vpop.f32.mrf.mxu0
    %382 = vdwg.mxu0
    %v383 = vpack.c.bf16 %v356, %v353
    %v384 = vpack.c.bf16 %v364, %v361
    %v385 = vpack.c.bf16 %v372, %v369
    %v386 = vpack.c.bf16 %v380, %v377
    %v387 = vld [vmem:[#allocation8] sm:$0xf]
    %v388 = vld [vmem:[#allocation8 + $0x4] sm:$0xf]
    %v389 = vld [vmem:[#allocation8 + $0x8] sm:$0xf]
    %v390 = vld [vmem:[#allocation8 + $0xc] sm:$0xf]
    %v391 = vld [vmem:[#allocation8 + $0x10] sm:$0xf]
    %v392 = vld [vmem:[#allocation8 + $0x14] sm:$0xf]
    %v393 = vld [vmem:[#allocation8 + $0x18] sm:$0xf]
    %v394 = vld [vmem:[#allocation8 + $0x1c] sm:$0xf]
    %v395 = vld [vmem:[#allocation8 + $0x20] sm:$0xf]
    %v396 = vld [vmem:[#allocation8 + $0x24] sm:$0xf]
    %v397 = vld [vmem:[#allocation8 + $0x28] sm:$0xf]
    %v398 = vld [vmem:[#allocation8 + $0x2c] sm:$0xf]
    %v399 = vld [vmem:[#allocation8 + $0x30] sm:$0xf]
    %v400 = vld [vmem:[#allocation8 + $0x34] sm:$0xf]
    %v401 = vld [vmem:[#allocation8 + $0x38] sm:$0xf]
    %v402 = vld [vmem:[#allocation8 + $0x3c] sm:$0xf]
    %v403 = vld [vmem:[%s7] sm:$0x1]
    %v405 = vlaneseq
    %v406 = vshrl.u32 %v405, 7
    %v407 = vsub.s32 0, %v406
    %v408 = vrot.slane %v403, %v407
    %v426 = vunpack.c.l.b16 %v387
    %v427 = vunpack.c.l.b16 %v388
    %v428 = vunpack.c.l.b16 %v389
    %v429 = vunpack.c.l.b16 %v390
    %v430 = vunpack.c.l.b16 %v391
    %v431 = vunpack.c.l.b16 %v392
    %v432 = vunpack.c.l.b16 %v393
    %v433 = vunpack.c.l.b16 %v394
    %v434 = vunpack.c.l.b16 %v395
    %v435 = vunpack.c.l.b16 %v396
    %v436 = vunpack.c.l.b16 %v397
    %v437 = vunpack.c.l.b16 %v398
    %v438 = vunpack.c.l.b16 %v399
    %v439 = vunpack.c.l.b16 %v400
    %v440 = vunpack.c.l.b16 %v401
    %v441 = vunpack.c.l.b16 %v402
    %v442 = vpack.c.b16 %v427, %v426
    %v443 = vpack.c.b16 %v429, %v428
    %v444 = vpack.c.b16 %v431, %v430
    %v445 = vpack.c.b16 %v433, %v432
    %v446 = vpack.c.b16 %v435, %v434
    %v447 = vpack.c.b16 %v437, %v436
    %v448 = vpack.c.b16 %v439, %v438
    %v449 = vpack.c.b16 %v441, %v440
    %458 = vmatprep.subr.bf16.mxu0 0
    %459 = vmatpush1.bf16.msra.mxu0 %v449
    %460 = vmatprep.subr.bf16.mxu0 0
    %461 = vmatpush1.bf16.msra.mxu0 %v448
    %462 = vmatprep.subr.bf16.mxu0 0
    %463 = vmatpush1.bf16.msra.mxu0 %v447
    %464 = vmatprep.subr.bf16.mxu0 0
    %465 = vmatpush1.bf16.msra.mxu0 %v446
    %466 = vmatprep.subr.bf16.mxu0 0
    %467 = vmatpush1.bf16.msra.mxu0 %v445
    %468 = vmatprep.subr.bf16.mxu0 0
    %469 = vmatpush1.bf16.msra.mxu0 %v444
    %470 = vmatprep.subr.bf16.mxu0 0
    %471 = vmatpush1.bf16.msra.mxu0 %v443
    %472 = vmatprep.subr.bf16.mxu0 0
    %473 = vmatpush1.bf16.msra.mxu0 %v442
    %474 = vmatprep.subr.bf16.mxu0 0
    %475 = vmatpush2.bf16.msra.mxu0 0
    %476 = vmatprep.subr.bf16.mxu0 0
    %477 = vmatpush2.bf16.msra.mxu0 0
    %478 = vmatprep.subr.bf16.mxu0 0
    %479 = vmatpush2.bf16.msra.mxu0 0
    %480 = vmatprep.subr.bf16.mxu0 0
    %481 = vmatpush2.bf16.msra.mxu0 0
    %482 = vmatprep.subr.bf16.mxu0 0
    %483 = vmatpush2.bf16.msra.mxu0 0
    %484 = vmatprep.subr.bf16.mxu0 0
    %485 = vmatpush2.bf16.msra.mxu0 0
    %486 = vmatprep.subr.bf16.mxu0 0
    %487 = vmatpush2.bf16.msra.mxu0 0
    %488 = vmatprep.subr.bf16.mxu0 0
    %489 = vmatpush2.bf16.msra.mxu0 0
    %490 = vmatprep.mubr.bf16.mxu0 0
    %491 = vmatmul.mubr.bf16.gmra.mxu0 %v243
    %v492 = vpop.f32.mrf.mxu0
    %v493 = vadd.f32 %v408, %v492
    %v494 = vpop.f32.mrf.mxu0
    %v495 = vpop.f32.mrf.mxu0
    %v496 = vadd.f32 %v408, %v495
    %v497 = vpop.f32.mrf.mxu0
    %498 = vmatprep.mubr.bf16.mxu0 0
    %499 = vmatmul.mubr.bf16.gmra.mxu0 %v244
    %v500 = vpop.f32.mrf.mxu0
    %v501 = vadd.f32 %v408, %v500
    %v502 = vpop.f32.mrf.mxu0
    %v503 = vpop.f32.mrf.mxu0
    %v504 = vadd.f32 %v408, %v503
    %v505 = vpop.f32.mrf.mxu0
    %506 = vmatprep.mubr.bf16.mxu0 0
    %507 = vmatmul.mubr.bf16.gmra.mxu0 %v245
    %v508 = vpop.f32.mrf.mxu0
    %v509 = vadd.f32 %v408, %v508
    %v510 = vpop.f32.mrf.mxu0
    %v511 = vpop.f32.mrf.mxu0
    %v512 = vadd.f32 %v408, %v511
    %v513 = vpop.f32.mrf.mxu0
    %514 = vmatprep.mubr.bf16.mxu0 0
    %515 = vmatmul.mubr.bf16.gmra.mxu0 %v246
    %v516 = vpop.f32.mrf.mxu0
    %v517 = vadd.f32 %v408, %v516
    %v518 = vpop.f32.mrf.mxu0
    %v519 = vpop.f32.mrf.mxu0
    %v520 = vadd.f32 %v408, %v519
    %v521 = vpop.f32.mrf.mxu0
    %522 = vdwg.mxu0
    %v523 = vpack.c.bf16 %v496, %v493
    %v524 = vpack.c.bf16 %v504, %v501
    %v525 = vpack.c.bf16 %v512, %v509
    %v526 = vpack.c.bf16 %v520, %v517
    %v527 = vld [vmem:[#allocation9] sm:$0xf]
    %v528 = vld [vmem:[#allocation9 + $0x4] sm:$0xf]
    %v529 = vld [vmem:[#allocation9 + $0x8] sm:$0xf]
    %v530 = vld [vmem:[#allocation9 + $0xc] sm:$0xf]
    %v531 = vld [vmem:[#allocation9 + $0x10] sm:$0xf]
    %v532 = vld [vmem:[#allocation9 + $0x14] sm:$0xf]
    %v533 = vld [vmem:[#allocation9 + $0x18] sm:$0xf]
    %v534 = vld [vmem:[#allocation9 + $0x1c] sm:$0xf]
    %v535 = vld [vmem:[#allocation9 + $0x20] sm:$0xf]
    %v536 = vld [vmem:[#allocation9 + $0x24] sm:$0xf]
    %v537 = vld [vmem:[#allocation9 + $0x28] sm:$0xf]
    %v538 = vld [vmem:[#allocation9 + $0x2c] sm:$0xf]
    %v539 = vld [vmem:[#allocation9 + $0x30] sm:$0xf]
    %v540 = vld [vmem:[#allocation9 + $0x34] sm:$0xf]
    %v541 = vld [vmem:[#allocation9 + $0x38] sm:$0xf]
    %v542 = vld [vmem:[#allocation9 + $0x3c] sm:$0xf]
    %v543 = vld [vmem:[%s8] sm:$0x1]
    %v545 = vlaneseq
    %v546 = vshrl.u32 %v545, 7
    %v547 = vsub.s32 0, %v546
    %v548 = vrot.slane %v543, %v547
    %v566 = vunpack.c.l.b16 %v527
    %v567 = vunpack.c.l.b16 %v528
    %v568 = vunpack.c.l.b16 %v529
    %v569 = vunpack.c.l.b16 %v530
    %v570 = vunpack.c.l.b16 %v531
    %v571 = vunpack.c.l.b16 %v532
    %v572 = vunpack.c.l.b16 %v533
    %v573 = vunpack.c.l.b16 %v534
    %v574 = vunpack.c.l.b16 %v535
    %v575 = vunpack.c.l.b16 %v536
    %v576 = vunpack.c.l.b16 %v537
    %v577 = vunpack.c.l.b16 %v538
    %v578 = vunpack.c.l.b16 %v539
    %v579 = vunpack.c.l.b16 %v540
    %v580 = vunpack.c.l.b16 %v541
    %v581 = vunpack.c.l.b16 %v542
    %v582 = vpack.c.b16 %v567, %v566
    %v583 = vpack.c.b16 %v569, %v568
    %v584 = vpack.c.b16 %v571, %v570
    %v585 = vpack.c.b16 %v573, %v572
    %v586 = vpack.c.b16 %v575, %v574
    %v587 = vpack.c.b16 %v577, %v576
    %v588 = vpack.c.b16 %v579, %v578
    %v589 = vpack.c.b16 %v581, %v580
    %598 = vmatprep.subr.bf16.mxu0 0
    %599 = vmatpush1.bf16.msra.mxu0 %v589
    %600 = vmatprep.subr.bf16.mxu0 0
    %601 = vmatpush1.bf16.msra.mxu0 %v588
    %602 = vmatprep.subr.bf16.mxu0 0
    %603 = vmatpush1.bf16.msra.mxu0 %v587
    %604 = vmatprep.subr.bf16.mxu0 0
    %605 = vmatpush1.bf16.msra.mxu0 %v586
    %606 = vmatprep.subr.bf16.mxu0 0
    %607 = vmatpush1.bf16.msra.mxu0 %v585
    %608 = vmatprep.subr.bf16.mxu0 0
    %609 = vmatpush1.bf16.msra.mxu0 %v584
    %610 = vmatprep.subr.bf16.mxu0 0
    %611 = vmatpush1.bf16.msra.mxu0 %v583
    %612 = vmatprep.subr.bf16.mxu0 0
    %613 = vmatpush1.bf16.msra.mxu0 %v582
    %614 = vmatprep.subr.bf16.mxu0 0
    %615 = vmatpush2.bf16.msra.mxu0 0
    %616 = vmatprep.subr.bf16.mxu0 0
    %617 = vmatpush2.bf16.msra.mxu0 0
    %618 = vmatprep.subr.bf16.mxu0 0
    %619 = vmatpush2.bf16.msra.mxu0 0
    %620 = vmatprep.subr.bf16.mxu0 0
    %621 = vmatpush2.bf16.msra.mxu0 0
    %622 = vmatprep.subr.bf16.mxu0 0
    %623 = vmatpush2.bf16.msra.mxu0 0
    %624 = vmatprep.subr.bf16.mxu0 0
    %625 = vmatpush2.bf16.msra.mxu0 0
    %626 = vmatprep.subr.bf16.mxu0 0
    %627 = vmatpush2.bf16.msra.mxu0 0
    %628 = vmatprep.subr.bf16.mxu0 0
    %629 = vmatpush2.bf16.msra.mxu0 0
    %630 = vmatprep.mubr.bf16.mxu0 0
    %631 = vmatmul.mubr.bf16.gmra.mxu0 %v243
    %v632 = vpop.f32.mrf.mxu0
    %v633 = vadd.f32 %v548, %v632
    %v634 = vpop.f32.mrf.mxu0
    %v635 = vpop.f32.mrf.mxu0
    %v636 = vadd.f32 %v548, %v635
    %v637 = vpop.f32.mrf.mxu0
    %638 = vmatprep.mubr.bf16.mxu0 0
    %639 = vmatmul.mubr.bf16.gmra.mxu0 %v244
    %v640 = vpop.f32.mrf.mxu0
    %v641 = vadd.f32 %v548, %v640
    %v642 = vpop.f32.mrf.mxu0
    %v643 = vpop.f32.mrf.mxu0
    %v644 = vadd.f32 %v548, %v643
    %v645 = vpop.f32.mrf.mxu0
    %646 = vmatprep.mubr.bf16.mxu0 0
    %647 = vmatmul.mubr.bf16.gmra.mxu0 %v245
    %v648 = vpop.f32.mrf.mxu0
    %v649 = vadd.f32 %v548, %v648
    %v650 = vpop.f32.mrf.mxu0
    %v651 = vpop.f32.mrf.mxu0
    %v652 = vadd.f32 %v548, %v651
    %v653 = vpop.f32.mrf.mxu0
    %654 = vmatprep.mubr.bf16.mxu0 0
    %655 = vmatmul.mubr.bf16.gmra.mxu0 %v246
    %v656 = vpop.f32.mrf.mxu0
    %v657 = vadd.f32 %v548, %v656
    %v658 = vpop.f32.mrf.mxu0
    %v659 = vpop.f32.mrf.mxu0
    %v660 = vadd.f32 %v548, %v659
    %v661 = vpop.f32.mrf.mxu0
    %662 = vdwg.mxu0
    %v663 = vpack.c.bf16 %v636, %v633
    %v664 = vpack.c.bf16 %v644, %v641
    %v665 = vpack.c.bf16 %v652, %v649
    %v666 = vpack.c.bf16 %v660, %v657
    %667 = vmatprep.subr.bf16.mxu0 0
    %668 = vmatpush1.bf16.xpose.msra.mxu0 0
    %669 = vmatprep.subr.bf16.mxu0 0
    %670 = vmatpush1.bf16.xpose.msra.mxu0 0
    %671 = vmatprep.subr.bf16.mxu0 0
    %672 = vmatpush1.bf16.xpose.msra.mxu0 0
    %673 = vmatprep.subr.bf16.mxu0 0
    %674 = vmatpush1.bf16.xpose.msra.mxu0 0
    %675 = vmatprep.subr.bf16.mxu0 0
    %676 = vmatpush1.bf16.xpose.msra.mxu0 0
    %677 = vmatprep.subr.bf16.mxu0 0
    %678 = vmatpush1.bf16.xpose.msra.mxu0 0
    %679 = vmatprep.subr.bf16.mxu0 0
    %680 = vmatpush1.bf16.xpose.msra.mxu0 0
    %681 = vmatprep.subr.bf16.mxu0 0
    %682 = vmatpush1.bf16.xpose.msra.mxu0 %v523
    %683 = vmatprep.subr.bf16.mxu0 0
    %684 = vmatpush2.bf16.xpose.msra.mxu0 0
    %685 = vmatprep.subr.bf16.mxu0 0
    %686 = vmatpush2.bf16.xpose.msra.mxu0 0
    %687 = vmatprep.subr.bf16.mxu0 0
    %688 = vmatpush2.bf16.xpose.msra.mxu0 0
    %689 = vmatprep.subr.bf16.mxu0 0
    %690 = vmatpush2.bf16.xpose.msra.mxu0 0
    %691 = vmatprep.subr.bf16.mxu0 0
    %692 = vmatpush2.bf16.xpose.msra.mxu0 0
    %693 = vmatprep.subr.bf16.mxu0 0
    %694 = vmatpush2.bf16.xpose.msra.mxu0 0
    %695 = vmatprep.subr.bf16.mxu0 0
    %696 = vmatpush2.bf16.xpose.msra.mxu0 0
    %697 = vmatprep.subr.bf16.mxu0 0
    %698 = vmatpush2.bf16.xpose.msra.mxu0 0
    %699 = vmatprep.mubr.bf16.mxu0 0
    %700 = vmatmul.mubr.bf16.gmra.mxu0 %v383
    %v701 = vpop.f32.mrf.mxu0
    %v702 = vadd.f32 0.0, %v701
    %v703 = vpop.f32.mrf.mxu0
    %v704 = vpop.f32.mrf.mxu0
    %v705 = vadd.f32 0.0, %v704
    %v706 = vpop.f32.mrf.mxu0
    %707 = vdwg.mxu0
    %708 = vmatprep.subr.bf16.mxu0 0
    %709 = vmatpush1.bf16.xpose.msra.mxu0 0
    %710 = vmatprep.subr.bf16.mxu0 0
    %711 = vmatpush1.bf16.xpose.msra.mxu0 0
    %712 = vmatprep.subr.bf16.mxu0 0
    %713 = vmatpush1.bf16.xpose.msra.mxu0 0
    %714 = vmatprep.subr.bf16.mxu0 0
    %715 = vmatpush1.bf16.xpose.msra.mxu0 0
    %716 = vmatprep.subr.bf16.mxu0 0
    %717 = vmatpush1.bf16.xpose.msra.mxu0 0
    %718 = vmatprep.subr.bf16.mxu0 0
    %719 = vmatpush1.bf16.xpose.msra.mxu0 0
    %720 = vmatprep.subr.bf16.mxu0 0
    %721 = vmatpush1.bf16.xpose.msra.mxu0 0
    %722 = vmatprep.subr.bf16.mxu0 0
    %723 = vmatpush1.bf16.xpose.msra.mxu0 %v524
    %724 = vmatprep.subr.bf16.mxu0 0
    %725 = vmatpush2.bf16.xpose.msra.mxu0 0
    %726 = vmatprep.subr.bf16.mxu0 0
    %727 = vmatpush2.bf16.xpose.msra.mxu0 0
    %728 = vmatprep.subr.bf16.mxu0 0
    %729 = vmatpush2.bf16.xpose.msra.mxu0 0
    %730 = vmatprep.subr.bf16.mxu0 0
    %731 = vmatpush2.bf16.xpose.msra.mxu0 0
    %732 = vmatprep.subr.bf16.mxu0 0
    %733 = vmatpush2.bf16.xpose.msra.mxu0 0
    %734 = vmatprep.subr.bf16.mxu0 0
    %735 = vmatpush2.bf16.xpose.msra.mxu0 0
    %736 = vmatprep.subr.bf16.mxu0 0
    %737 = vmatpush2.bf16.xpose.msra.mxu0 0
    %738 = vmatprep.subr.bf16.mxu0 0
    %739 = vmatpush2.bf16.xpose.msra.mxu0 0
    %740 = vmatprep.mubr.bf16.mxu0 0
    %741 = vmatmul.mubr.bf16.gmra.mxu0 %v384
    %v742 = vpop.f32.mrf.mxu0
    %v743 = vadd.f32 0.0, %v742
    %v744 = vpop.f32.mrf.mxu0
    %v745 = vpop.f32.mrf.mxu0
    %v746 = vadd.f32 0.0, %v745
    %v747 = vpop.f32.mrf.mxu0
    %748 = vdwg.mxu0
    %749 = vmatprep.subr.bf16.mxu0 0
    %750 = vmatpush1.bf16.xpose.msra.mxu0 0
    %751 = vmatprep.subr.bf16.mxu0 0
    %752 = vmatpush1.bf16.xpose.msra.mxu0 0
    %753 = vmatprep.subr.bf16.mxu0 0
    %754 = vmatpush1.bf16.xpose.msra.mxu0 0
    %755 = vmatprep.subr.bf16.mxu0 0
    %756 = vmatpush1.bf16.xpose.msra.mxu0 0
    %757 = vmatprep.subr.bf16.mxu0 0
    %758 = vmatpush1.bf16.xpose.msra.mxu0 0
    %759 = vmatprep.subr.bf16.mxu0 0
    %760 = vmatpush1.bf16.xpose.msra.mxu0 0
    %761 = vmatprep.subr.bf16.mxu0 0
    %762 = vmatpush1.bf16.xpose.msra.mxu0 0
    %763 = vmatprep.subr.bf16.mxu0 0
    %764 = vmatpush1.bf16.xpose.msra.mxu0 %v525
    %765 = vmatprep.subr.bf16.mxu0 0
    %766 = vmatpush2.bf16.xpose.msra.mxu0 0
    %767 = vmatprep.subr.bf16.mxu0 0
    %768 = vmatpush2.bf16.xpose.msra.mxu0 0
    %769 = vmatprep.subr.bf16.mxu0 0
    %770 = vmatpush2.bf16.xpose.msra.mxu0 0
    %771 = vmatprep.subr.bf16.mxu0 0
    %772 = vmatpush2.bf16.xpose.msra.mxu0 0
    %773 = vmatprep.subr.bf16.mxu0 0
    %774 = vmatpush2.bf16.xpose.msra.mxu0 0
    %775 = vmatprep.subr.bf16.mxu0 0
    %776 = vmatpush2.bf16.xpose.msra.mxu0 0
    %777 = vmatprep.subr.bf16.mxu0 0
    %778 = vmatpush2.bf16.xpose.msra.mxu0 0
    %779 = vmatprep.subr.bf16.mxu0 0
    %780 = vmatpush2.bf16.xpose.msra.mxu0 0
    %781 = vmatprep.mubr.bf16.mxu0 0
    %782 = vmatmul.mubr.bf16.gmra.mxu0 %v385
    %v783 = vpop.f32.mrf.mxu0
    %v784 = vadd.f32 0.0, %v783
    %v785 = vpop.f32.mrf.mxu0
    %v786 = vpop.f32.mrf.mxu0
    %v787 = vadd.f32 0.0, %v786
    %v788 = vpop.f32.mrf.mxu0
    %789 = vdwg.mxu0
    %790 = vmatprep.subr.bf16.mxu0 0
    %791 = vmatpush1.bf16.xpose.msra.mxu0 0
    %792 = vmatprep.subr.bf16.mxu0 0
    %793 = vmatpush1.bf16.xpose.msra.mxu0 0
    %794 = vmatprep.subr.bf16.mxu0 0
    %795 = vmatpush1.bf16.xpose.msra.mxu0 0
    %796 = vmatprep.subr.bf16.mxu0 0
    %797 = vmatpush1.bf16.xpose.msra.mxu0 0
    %798 = vmatprep.subr.bf16.mxu0 0
    %799 = vmatpush1.bf16.xpose.msra.mxu0 0
    %800 = vmatprep.subr.bf16.mxu0 0
    %801 = vmatpush1.bf16.xpose.msra.mxu0 0
    %802 = vmatprep.subr.bf16.mxu0 0
    %803 = vmatpush1.bf16.xpose.msra.mxu0 0
    %804 = vmatprep.subr.bf16.mxu0 0
    %805 = vmatpush1.bf16.xpose.msra.mxu0 %v526
    %806 = vmatprep.subr.bf16.mxu0 0
    %807 = vmatpush2.bf16.xpose.msra.mxu0 0
    %808 = vmatprep.subr.bf16.mxu0 0
    %809 = vmatpush2.bf16.xpose.msra.mxu0 0
    %810 = vmatprep.subr.bf16.mxu0 0
    %811 = vmatpush2.bf16.xpose.msra.mxu0 0
    %812 = vmatprep.subr.bf16.mxu0 0
    %813 = vmatpush2.bf16.xpose.msra.mxu0 0
    %814 = vmatprep.subr.bf16.mxu0 0
    %815 = vmatpush2.bf16.xpose.msra.mxu0 0
    %816 = vmatprep.subr.bf16.mxu0 0
    %817 = vmatpush2.bf16.xpose.msra.mxu0 0
    %818 = vmatprep.subr.bf16.mxu0 0
    %819 = vmatpush2.bf16.xpose.msra.mxu0 0
    %820 = vmatprep.subr.bf16.mxu0 0
    %821 = vmatpush2.bf16.xpose.msra.mxu0 0
    %822 = vmatprep.mubr.bf16.mxu0 0
    %823 = vmatmul.mubr.bf16.gmra.mxu0 %v386
    %v824 = vpop.f32.mrf.mxu0
    %v825 = vadd.f32 0.0, %v824
    %v826 = vpop.f32.mrf.mxu0
    %v827 = vpop.f32.mrf.mxu0
    %v828 = vadd.f32 0.0, %v827
    %v829 = vpop.f32.mrf.mxu0
    %830 = vdwg.mxu0
    %vm831 = vcmask 130048
    %v832 = vsel %vm831, %v702, -inf
    %833 = vmax.xlane.f32.xlu0 %v832
    %v834 = vpop.xlane.xlu0 %833
    %v835 = vsel %vm831, %v705, -inf
    %836 = vmax.xlane.f32.xlu0 %v835
    %v837 = vpop.xlane.xlu0 %836
    %v838 = vsel %vm831, %v743, -inf
    %839 = vmax.xlane.f32.xlu0 %v838
    %v840 = vpop.xlane.xlu0 %839
    %v841 = vsel %vm831, %v746, -inf
    %842 = vmax.xlane.f32.xlu0 %v841
    %v843 = vpop.xlane.xlu0 %842
    %v844 = vsel %vm831, %v784, -inf
    %845 = vmax.xlane.f32.xlu0 %v844
    %v846 = vpop.xlane.xlu0 %845
    %v847 = vsel %vm831, %v787, -inf
    %848 = vmax.xlane.f32.xlu0 %v847
    %v849 = vpop.xlane.xlu0 %848
    %v850 = vsel %vm831, %v825, -inf
    %851 = vmax.xlane.f32.xlu0 %v850
    %v852 = vpop.xlane.xlu0 %851
    %v853 = vsel %vm831, %v828, -inf
    %854 = vmax.xlane.f32.xlu0 %v853
    %v855 = vpop.xlane.xlu0 %854
    %v856 = vsub.f32 %v702, %v834
    %v857 = vsub.f32 %v705, %v837
    %v858 = vsub.f32 %v743, %v840
    %v859 = vsub.f32 %v746, %v843
    %v860 = vsub.f32 %v784, %v846
    %v861 = vsub.f32 %v787, %v849
    %v862 = vsub.f32 %v825, %v852
    %v863 = vsub.f32 %v828, %v855
    %v864 = vmul.f32 %v856, 1.442695
    %v865 = vpow.pop %v864
    %v866 = vmul.f32 %v857, 1.442695
    %v867 = vpow.pop %v866
    %v868 = vmul.f32 %v858, 1.442695
    %v869 = vpow.pop %v868
    %v870 = vmul.f32 %v859, 1.442695
    %v871 = vpow.pop %v870
    %v872 = vmul.f32 %v860, 1.442695
    %v873 = vpow.pop %v872
    %v874 = vmul.f32 %v861, 1.442695
    %v875 = vpow.pop %v874
    %v876 = vmul.f32 %v862, 1.442695
    %v877 = vpow.pop %v876
    %v878 = vmul.f32 %v863, 1.442695
    %v879 = vpow.pop %v878
    %v880 = vsel %vm831, %v865, 0.0
    %881 = vadd.xlane.f32.xlu0 %v880
    %v882 = vpop.xlane.xlu0 %881
    %v883 = vsel %vm831, %v867, 0.0
    %884 = vadd.xlane.f32.xlu0 %v883
    %v885 = vpop.xlane.xlu0 %884
    %v886 = vsel %vm831, %v869, 0.0
    %887 = vadd.xlane.f32.xlu0 %v886
    %v888 = vpop.xlane.xlu0 %887
    %v889 = vsel %vm831, %v871, 0.0
    %890 = vadd.xlane.f32.xlu0 %v889
    %v891 = vpop.xlane.xlu0 %890
    %v892 = vsel %vm831, %v873, 0.0
    %893 = vadd.xlane.f32.xlu0 %v892
    %v894 = vpop.xlane.xlu0 %893
    %v895 = vsel %vm831, %v875, 0.0
    %896 = vadd.xlane.f32.xlu0 %v895
    %v897 = vpop.xlane.xlu0 %896
    %v898 = vsel %vm831, %v877, 0.0
    %899 = vadd.xlane.f32.xlu0 %v898
    %v900 = vpop.xlane.xlu0 %899
    %v901 = vsel %vm831, %v879, 0.0
    %902 = vadd.xlane.f32.xlu0 %v901
    %v903 = vpop.xlane.xlu0 %902
    %v904 = vrcp.pop %v882
    %v905 = vrcp.pop %v885
    %v906 = vrcp.pop %v888
    %v907 = vrcp.pop %v891
    %v908 = vrcp.pop %v894
    %v909 = vrcp.pop %v897
    %v910 = vrcp.pop %v900
    %v911 = vrcp.pop %v903
    %v912 = vmul.f32 %v865, %v904
    %v913 = vmul.f32 %v867, %v905
    %v914 = vmul.f32 %v869, %v906
    %v915 = vmul.f32 %v871, %v907
    %v916 = vmul.f32 %v873, %v908
    %v917 = vmul.f32 %v875, %v909
    %v918 = vmul.f32 %v877, %v910
    %v919 = vmul.f32 %v879, %v911
    %v920 = vpack.c.bf16 %v913, %v912
    %v921 = vpack.c.bf16 %v915, %v914
    %v922 = vpack.c.bf16 %v917, %v916
    %v923 = vpack.c.bf16 %v919, %v918
    %v925 = vsel %vm831, %v920, 0
    %927 = vmatprep.subr.bf16.mxu0 0
    %928 = vmatpush1.bf16.msra.mxu0 0
    %929 = vmatprep.subr.bf16.mxu0 0
    %930 = vmatpush1.bf16.msra.mxu0 0
    %931 = vmatprep.subr.bf16.mxu0 0
    %932 = vmatpush1.bf16.msra.mxu0 0
    %933 = vmatprep.subr.bf16.mxu0 0
    %934 = vmatpush1.bf16.msra.mxu0 0
    %935 = vmatprep.subr.bf16.mxu0 0
    %936 = vmatpush1.bf16.msra.mxu0 0
    %937 = vmatprep.subr.bf16.mxu0 0
    %938 = vmatpush1.bf16.msra.mxu0 0
    %939 = vmatprep.subr.bf16.mxu0 0
    %940 = vmatpush1.bf16.msra.mxu0 0
    %941 = vmatprep.subr.bf16.mxu0 0
    %942 = vmatpush1.bf16.msra.mxu0 %v663
    %943 = vmatprep.subr.bf16.mxu0 0
    %944 = vmatpush2.bf16.msra.mxu0 0
    %945 = vmatprep.subr.bf16.mxu0 0
    %946 = vmatpush2.bf16.msra.mxu0 0
    %947 = vmatprep.subr.bf16.mxu0 0
    %948 = vmatpush2.bf16.msra.mxu0 0
    %949 = vmatprep.subr.bf16.mxu0 0
    %950 = vmatpush2.bf16.msra.mxu0 0
    %951 = vmatprep.subr.bf16.mxu0 0
    %952 = vmatpush2.bf16.msra.mxu0 0
    %953 = vmatprep.subr.bf16.mxu0 0
    %954 = vmatpush2.bf16.msra.mxu0 0
    %955 = vmatprep.subr.bf16.mxu0 0
    %956 = vmatpush2.bf16.msra.mxu0 0
    %957 = vmatprep.subr.bf16.mxu0 0
    %958 = vmatpush2.bf16.msra.mxu0 0
    %959 = vmatprep.mubr.bf16.mxu0 0
    %960 = vmatmul.mubr.bf16.gmra.mxu0 %v925
    %v961 = vpop.f32.mrf.mxu0
    %v962 = vadd.f32 0.0, %v961
    %v963 = vpop.f32.mrf.mxu0
    %v964 = vpop.f32.mrf.mxu0
    %v965 = vadd.f32 0.0, %v964
    %v966 = vpop.f32.mrf.mxu0
    %967 = vdwg.mxu0
    %v969 = vsel %vm831, %v921, 0
    %971 = vmatprep.subr.bf16.mxu0 0
    %972 = vmatpush1.bf16.msra.mxu0 0
    %973 = vmatprep.subr.bf16.mxu0 0
    %974 = vmatpush1.bf16.msra.mxu0 0
    %975 = vmatprep.subr.bf16.mxu0 0
    %976 = vmatpush1.bf16.msra.mxu0 0
    %977 = vmatprep.subr.bf16.mxu0 0
    %978 = vmatpush1.bf16.msra.mxu0 0
    %979 = vmatprep.subr.bf16.mxu0 0
    %980 = vmatpush1.bf16.msra.mxu0 0
    %981 = vmatprep.subr.bf16.mxu0 0
    %982 = vmatpush1.bf16.msra.mxu0 0
    %983 = vmatprep.subr.bf16.mxu0 0
    %984 = vmatpush1.bf16.msra.mxu0 0
    %985 = vmatprep.subr.bf16.mxu0 0
    %986 = vmatpush1.bf16.msra.mxu0 %v664
    %987 = vmatprep.subr.bf16.mxu0 0
    %988 = vmatpush2.bf16.msra.mxu0 0
    %989 = vmatprep.subr.bf16.mxu0 0
    %990 = vmatpush2.bf16.msra.mxu0 0
    %991 = vmatprep.subr.bf16.mxu0 0
    %992 = vmatpush2.bf16.msra.mxu0 0
    %993 = vmatprep.subr.bf16.mxu0 0
    %994 = vmatpush2.bf16.msra.mxu0 0
    %995 = vmatprep.subr.bf16.mxu0 0
    %996 = vmatpush2.bf16.msra.mxu0 0
    %997 = vmatprep.subr.bf16.mxu0 0
    %998 = vmatpush2.bf16.msra.mxu0 0
    %999 = vmatprep.subr.bf16.mxu0 0
    %1000 = vmatpush2.bf16.msra.mxu0 0
    %1001 = vmatprep.subr.bf16.mxu0 0
    %1002 = vmatpush2.bf16.msra.mxu0 0
    %1003 = vmatprep.mubr.bf16.mxu0 0
    %1004 = vmatmul.mubr.bf16.gmra.mxu0 %v969
    %v1005 = vpop.f32.mrf.mxu0
    %v1006 = vadd.f32 0.0, %v1005
    %v1007 = vpop.f32.mrf.mxu0
    %v1008 = vpop.f32.mrf.mxu0
    %v1009 = vadd.f32 0.0, %v1008
    %v1010 = vpop.f32.mrf.mxu0
    %1011 = vdwg.mxu0
    %v1013 = vsel %vm831, %v922, 0
    %1015 = vmatprep.subr.bf16.mxu0 0
    %1016 = vmatpush1.bf16.msra.mxu0 0
    %1017 = vmatprep.subr.bf16.mxu0 0
    %1018 = vmatpush1.bf16.msra.mxu0 0
    %1019 = vmatprep.subr.bf16.mxu0 0
    %1020 = vmatpush1.bf16.msra.mxu0 0
    %1021 = vmatprep.subr.bf16.mxu0 0
    %1022 = vmatpush1.bf16.msra.mxu0 0
    %1023 = vmatprep.subr.bf16.mxu0 0
    %1024 = vmatpush1.bf16.msra.mxu0 0
    %1025 = vmatprep.subr.bf16.mxu0 0
    %1026 = vmatpush1.bf16.msra.mxu0 0
    %1027 = vmatprep.subr.bf16.mxu0 0
    %1028 = vmatpush1.bf16.msra.mxu0 0
    %1029 = vmatprep.subr.bf16.mxu0 0
    %1030 = vmatpush1.bf16.msra.mxu0 %v665
    %1031 = vmatprep.subr.bf16.mxu0 0
    %1032 = vmatpush2.bf16.msra.mxu0 0
    %1033 = vmatprep.subr.bf16.mxu0 0
    %1034 = vmatpush2.bf16.msra.mxu0 0
    %1035 = vmatprep.subr.bf16.mxu0 0
    %1036 = vmatpush2.bf16.msra.mxu0 0
    %1037 = vmatprep.subr.bf16.mxu0 0
    %1038 = vmatpush2.bf16.msra.mxu0 0
    %1039 = vmatprep.subr.bf16.mxu0 0
    %1040 = vmatpush2.bf16.msra.mxu0 0
    %1041 = vmatprep.subr.bf16.mxu0 0
    %1042 = vmatpush2.bf16.msra.mxu0 0
    %1043 = vmatprep.subr.bf16.mxu0 0
    %1044 = vmatpush2.bf16.msra.mxu0 0
    %1045 = vmatprep.subr.bf16.mxu0 0
    %1046 = vmatpush2.bf16.msra.mxu0 0
    %1047 = vmatprep.mubr.bf16.mxu0 0
    %1048 = vmatmul.mubr.bf16.gmra.mxu0 %v1013
    %v1049 = vpop.f32.mrf.mxu0
    %v1050 = vadd.f32 0.0, %v1049
    %v1051 = vpop.f32.mrf.mxu0
    %v1052 = vpop.f32.mrf.mxu0
    %v1053 = vadd.f32 0.0, %v1052
    %v1054 = vpop.f32.mrf.mxu0
    %1055 = vdwg.mxu0
    %v1057 = vsel %vm831, %v923, 0
    %1059 = vmatprep.subr.bf16.mxu0 0
    %1060 = vmatpush1.bf16.msra.mxu0 0
    %1061 = vmatprep.subr.bf16.mxu0 0
    %1062 = vmatpush1.bf16.msra.mxu0 0
    %1063 = vmatprep.subr.bf16.mxu0 0
    %1064 = vmatpush1.bf16.msra.mxu0 0
    %1065 = vmatprep.subr.bf16.mxu0 0
    %1066 = vmatpush1.bf16.msra.mxu0 0
    %1067 = vmatprep.subr.bf16.mxu0 0
    %1068 = vmatpush1.bf16.msra.mxu0 0
    %1069 = vmatprep.subr.bf16.mxu0 0
    %1070 = vmatpush1.bf16.msra.mxu0 0
    %1071 = vmatprep.subr.bf16.mxu0 0
    %1072 = vmatpush1.bf16.msra.mxu0 0
    %1073 = vmatprep.subr.bf16.mxu0 0
    %1074 = vmatpush1.bf16.msra.mxu0 %v666
    %1075 = vmatprep.subr.bf16.mxu0 0
    %1076 = vmatpush2.bf16.msra.mxu0 0
    %1077 = vmatprep.subr.bf16.mxu0 0
    %1078 = vmatpush2.bf16.msra.mxu0 0
    %1079 = vmatprep.subr.bf16.mxu0 0
    %1080 = vmatpush2.bf16.msra.mxu0 0
    %1081 = vmatprep.subr.bf16.mxu0 0
    %1082 = vmatpush2.bf16.msra.mxu0 0
    %1083 = vmatprep.subr.bf16.mxu0 0
    %1084 = vmatpush2.bf16.msra.mxu0 0
    %1085 = vmatprep.subr.bf16.mxu0 0
    %1086 = vmatpush2.bf16.msra.mxu0 0
    %1087 = vmatprep.subr.bf16.mxu0 0
    %1088 = vmatpush2.bf16.msra.mxu0 0
    %1089 = vmatprep.subr.bf16.mxu0 0
    %1090 = vmatpush2.bf16.msra.mxu0 0
    %1091 = vmatprep.mubr.bf16.mxu0 0
    %1092 = vmatmul.mubr.bf16.gmra.mxu0 %v1057
    %v1093 = vpop.f32.mrf.mxu0
    %v1094 = vadd.f32 0.0, %v1093
    %v1095 = vpop.f32.mrf.mxu0
    %v1096 = vpop.f32.mrf.mxu0
    %v1097 = vadd.f32 0.0, %v1096
    %v1098 = vpop.f32.mrf.mxu0
    %1099 = vdwg.mxu0
    %v1100 = vpack.c.bf16 %v965, %v962
    %v1101 = vpack.c.bf16 %v1009, %v1006
    %v1102 = vpack.c.bf16 %v1053, %v1050
    %v1103 = vpack.c.bf16 %v1097, %v1094
    %v1104 = vld [vmem:[#allocation11] sm:$0xf]
    %v1105 = vld [vmem:[#allocation11 + $0x4] sm:$0xf]
    %v1106 = vld [vmem:[#allocation11 + $0x8] sm:$0xf]
    %v1107 = vld [vmem:[#allocation11 + $0xc] sm:$0xf]
    %v1108 = vld [vmem:[#allocation11 + $0x10] sm:$0xf]
    %v1109 = vld [vmem:[#allocation11 + $0x14] sm:$0xf]
    %v1110 = vld [vmem:[#allocation11 + $0x18] sm:$0xf]
    %v1111 = vld [vmem:[#allocation11 + $0x1c] sm:$0xf]
    %v1112 = vld [vmem:[#allocation11 + $0x20] sm:$0xf]
    %v1113 = vld [vmem:[#allocation11 + $0x24] sm:$0xf]
    %v1114 = vld [vmem:[#allocation11 + $0x28] sm:$0xf]
    %v1115 = vld [vmem:[#allocation11 + $0x2c] sm:$0xf]
    %v1116 = vld [vmem:[#allocation11 + $0x30] sm:$0xf]
    %v1117 = vld [vmem:[#allocation11 + $0x34] sm:$0xf]
    %v1118 = vld [vmem:[#allocation11 + $0x38] sm:$0xf]
    %v1119 = vld [vmem:[#allocation11 + $0x3c] sm:$0xf]
    %v1120 = vld [vmem:[%s10] sm:$0x1]
    %v1122 = vlaneseq
    %v1123 = vshrl.u32 %v1122, 7
    %v1124 = vsub.s32 0, %v1123
    %v1125 = vrot.slane %v1120, %v1124
    %v1143 = vunpack.c.l.b16 %v1104
    %v1144 = vunpack.c.l.b16 %v1105
    %v1145 = vunpack.c.l.b16 %v1106
    %v1146 = vunpack.c.l.b16 %v1107
    %v1147 = vunpack.c.l.b16 %v1108
    %v1148 = vunpack.c.l.b16 %v1109
    %v1149 = vunpack.c.l.b16 %v1110
    %v1150 = vunpack.c.l.b16 %v1111
    %v1151 = vunpack.c.l.b16 %v1112
    %v1152 = vunpack.c.l.b16 %v1113
    %v1153 = vunpack.c.l.b16 %v1114
    %v1154 = vunpack.c.l.b16 %v1115
    %v1155 = vunpack.c.l.b16 %v1116
    %v1156 = vunpack.c.l.b16 %v1117
    %v1157 = vunpack.c.l.b16 %v1118
    %v1158 = vunpack.c.l.b16 %v1119
    %v1159 = vpack.c.b16 %v1144, %v1143
    %v1160 = vpack.c.b16 %v1146, %v1145
    %v1161 = vpack.c.b16 %v1148, %v1147
    %v1162 = vpack.c.b16 %v1150, %v1149
    %v1163 = vpack.c.b16 %v1152, %v1151
    %v1164 = vpack.c.b16 %v1154, %v1153
    %v1165 = vpack.c.b16 %v1156, %v1155
    %v1166 = vpack.c.b16 %v1158, %v1157
    %1175 = vmatprep.subr.bf16.mxu0 0
    %1176 = vmatpush1.bf16.msra.mxu0 %v1166
    %1177 = vmatprep.subr.bf16.mxu0 0
    %1178 = vmatpush1.bf16.msra.mxu0 %v1165
    %1179 = vmatprep.subr.bf16.mxu0 0
    %1180 = vmatpush1.bf16.msra.mxu0 %v1164
    %1181 = vmatprep.subr.bf16.mxu0 0
    %1182 = vmatpush1.bf16.msra.mxu0 %v1163
    %1183 = vmatprep.subr.bf16.mxu0 0
    %1184 = vmatpush1.bf16.msra.mxu0 %v1162
    %1185 = vmatprep.subr.bf16.mxu0 0
    %1186 = vmatpush1.bf16.msra.mxu0 %v1161
    %1187 = vmatprep.subr.bf16.mxu0 0
    %1188 = vmatpush1.bf16.msra.mxu0 %v1160
    %1189 = vmatprep.subr.bf16.mxu0 0
    %1190 = vmatpush1.bf16.msra.mxu0 %v1159
    %1191 = vmatprep.subr.bf16.mxu0 0
    %1192 = vmatpush2.bf16.msra.mxu0 0
    %1193 = vmatprep.subr.bf16.mxu0 0
    %1194 = vmatpush2.bf16.msra.mxu0 0
    %1195 = vmatprep.subr.bf16.mxu0 0
    %1196 = vmatpush2.bf16.msra.mxu0 0
    %1197 = vmatprep.subr.bf16.mxu0 0
    %1198 = vmatpush2.bf16.msra.mxu0 0
    %1199 = vmatprep.subr.bf16.mxu0 0
    %1200 = vmatpush2.bf16.msra.mxu0 0
    %1201 = vmatprep.subr.bf16.mxu0 0
    %1202 = vmatpush2.bf16.msra.mxu0 0
    %1203 = vmatprep.subr.bf16.mxu0 0
    %1204 = vmatpush2.bf16.msra.mxu0 0
    %1205 = vmatprep.subr.bf16.mxu0 0
    %1206 = vmatpush2.bf16.msra.mxu0 0
    %1207 = vmatprep.mubr.bf16.mxu0 0
    %1208 = vmatmul.mubr.bf16.gmra.mxu0 %v1100
    %v1209 = vpop.f32.mrf.mxu0
    %v1210 = vadd.f32 %v1125, %v1209
    %v1211 = vpop.f32.mrf.mxu0
    %v1212 = vpop.f32.mrf.mxu0
    %v1213 = vadd.f32 %v1125, %v1212
    %v1214 = vpop.f32.mrf.mxu0
    %1215 = vmatprep.mubr.bf16.mxu0 0
    %1216 = vmatmul.mubr.bf16.gmra.mxu0 %v1101
    %v1217 = vpop.f32.mrf.mxu0
    %v1218 = vadd.f32 %v1125, %v1217
    %v1219 = vpop.f32.mrf.mxu0
    %v1220 = vpop.f32.mrf.mxu0
    %v1221 = vadd.f32 %v1125, %v1220
    %v1222 = vpop.f32.mrf.mxu0
    %1223 = vmatprep.mubr.bf16.mxu0 0
    %1224 = vmatmul.mubr.bf16.gmra.mxu0 %v1102
    %v1225 = vpop.f32.mrf.mxu0
    %v1226 = vadd.f32 %v1125, %v1225
    %v1227 = vpop.f32.mrf.mxu0
    %v1228 = vpop.f32.mrf.mxu0
    %v1229 = vadd.f32 %v1125, %v1228
    %v1230 = vpop.f32.mrf.mxu0
    %1231 = vmatprep.mubr.bf16.mxu0 0
    %1232 = vmatmul.mubr.bf16.gmra.mxu0 %v1103
    %v1233 = vpop.f32.mrf.mxu0
    %v1234 = vadd.f32 %v1125, %v1233
    %v1235 = vpop.f32.mrf.mxu0
    %v1236 = vpop.f32.mrf.mxu0
    %v1237 = vadd.f32 %v1125, %v1236
    %v1238 = vpop.f32.mrf.mxu0
    %1239 = vdwg.mxu0
    %v1240 = vld [vmem:[#allocation2] sm:$0xff]
    %v1241 = vld [vmem:[#allocation2 + $0x8] sm:$0xff]
    %v1242 = vld [vmem:[#allocation2 + $0x10] sm:$0xff]
    %v1243 = vld [vmem:[#allocation2 + $0x18] sm:$0xff]
    %v1244 = vld [vmem:[#allocation2 + $0x20] sm:$0xff]
    %v1245 = vld [vmem:[#allocation2 + $0x28] sm:$0xff]
    %v1246 = vld [vmem:[#allocation2 + $0x30] sm:$0xff]
    %v1247 = vld [vmem:[#allocation2 + $0x38] sm:$0xff]
    %v1248 = vadd.f32 %v1210, %v1240
    %v1249 = vadd.f32 %v1213, %v1241
    %v1250 = vadd.f32 %v1218, %v1242
    %v1251 = vadd.f32 %v1221, %v1243
    %v1252 = vadd.f32 %v1226, %v1244
    %v1253 = vadd.f32 %v1229, %v1245
    %v1254 = vadd.f32 %v1234, %v1246
    %v1255 = vadd.f32 %v1237, %v1247
    %1256 = vst [vmem:[#allocation12] sm:$0xff] %v1248
    %1257 = vst [vmem:[#allocation12 + $0x8] sm:$0xff] %v1249
    %1258 = vst [vmem:[#allocation12 + $0x10] sm:$0xff] %v1250
    %1259 = vst [vmem:[#allocation12 + $0x18] sm:$0xff] %v1251
    %1260 = vst [vmem:[#allocation12 + $0x20] sm:$0xff] %v1252
    %1261 = vst [vmem:[#allocation12 + $0x28] sm:$0xff] %v1253
    %1262 = vst [vmem:[#allocation12 + $0x30] sm:$0xff] %v1254
    %1263 = vst [vmem:[#allocation12 + $0x38] sm:$0xff] %v1255
    // Predicated region
    $region66: #{tpu_custom_call.1} parent=1 // pred_check
      _
    $region67: #{tpu_custom_call.1} parent=1 // pred_check_branch
      %1265 = sbr.rel (0) target = $region69
    $region68: #{tpu_custom_call.1} parent=1 // pred_region
      %s1267 = ssub.s32 1024, 1024
      %1268 = vsyncadd [#allocation5], %s1267
      %s1269 = sshll.u32 [#allocation12], 4
      %s1270 = int_to_ptr.vmem [resolvable:$true] %s1269
      %1275 = dma.vmem_to_hbm [thread:$0]  %s1270, 1024, %s11, [#allocation5], 128, 128, 8
    $region69: #{tpu_custom_call.1} parent=1 // pred_fallthru
      _
    // Predicated region
    $region70: #{tpu_custom_call.1} parent=1 // pred_check
      _
    $region71: #{tpu_custom_call.1} parent=1 // pred_check_branch
      %1277 = sbr.rel (0) target = $region73
    $region72: #{tpu_custom_call.1} parent=1 // pred_region
      %1278 = dma.done [#allocation5], 1024
    $region73: #{tpu_custom_call.1} parent=1 // pred_fallthru
      _
    %1279 = vsyncpa [#allocation4], 1
    %1280 = vsyncpa [#allocation7], 1
    %1281 = vsyncpa [#allocation10], 1
    %1282 = vsyncpa [#allocation5], 1

</llo_original>
